<compile_context>
chip_gen: v6e
topology: v6e:2x2x1
jax: 0.10.0
libtpu: 0.0.40
codegen_flags: <defaults>
</compile_context>

<pallas_src>
import functools
import math

import jax
import jax.numpy as jnp
from jax.experimental import pallas as pl
from jax.experimental.pallas import tpu as pltpu


def _pe_kernel(consts_ref, out_ref, *, w):
    """One pixel-tile of the positional encoding.

    consts_ref : (2F, 3)   columns [A, B, C] with  theta = x*A + y*B + C
    out_ref    : (2F, TP)  lane-dense tile of the flattened (2F, padded_HW) output
    """
    _, tp = out_ref.shape

    # Global flattened pixel index p (f32) for every lane of this tile.
    base = (pl.program_id(0) * tp).astype(jnp.float32)
    p = jax.lax.broadcasted_iota(jnp.int32, (1, tp), 1).astype(jnp.float32) + base

    w_f = jnp.float32(w)
    # y = p // w, x = p % w, recovered in f32.  The +0.5 keeps floor() robust to
    # a couple ulp of division rounding; exact while H*W stays << 2^22 pixels
    # (guarded in the wrapper).
    y = jnp.floor((p + 0.5) / w_f)               # row index   (1, TP)
    x = p - y * w_f                              # col index   (1, TP), exact

    a = consts_ref[:, 0:1]                       # (2F, 1)
    b = consts_ref[:, 1:2]                       # (2F, 1)
    c = consts_ref[:, 2:3]                       # (2F, 1)

    # All affines / 2*pi scale pre-folded into A, B, C; cos half folded into
    # sin via a +pi/2 phase baked into C for the second F channels.
    theta = x * a + y * b + c                    # (2F, TP)
    out_ref[...] = jnp.sin(theta)


def _round_up(n, m):
    return (n + m - 1) // m * m


def _choose_tile(total):
    """Pixel tile: multiple of 128, <= 8192 lanes, >= 2 grid steps when possible."""
    if total <= 128:
        return 128
    half = _round_up(pl.cdiv(total, 2), 128)     # keep 2+ balanced steps (v7x megacore)
    return min(8192, half)


def position_embedding_random(gaussian_matrix, size):
    """Pallas equivalent of PositionEmbeddingRandom.forward(size).

    gaussian_matrix : (2, num_pos_feats) float32
    size            : (h, w) python ints
    returns         : (2 * num_pos_feats, h, w) float32   (CHW, like PyTorch)
    """
    h, w = size
    f = gaussian_matrix.shape[1]
    c = 2 * f
    total = h * w
    # Guard: the in-kernel f32 row/col recovery is exact only for small grids.
    assert total < (1 << 22), "H*W too large for the f32 index-recovery path"
    # TODO(synk): integer div/mod path for H*W >= 2^22 pixels.

    g = gaussian_matrix.astype(jnp.float32)
    gx = jnp.concatenate([g[0, :], g[0, :]])                       # (2F,)
    gy = jnp.concatenate([g[1, :], g[1, :]])                       # (2F,)
    phase = jnp.concatenate([jnp.zeros((f,), jnp.float32),
                             jnp.full((f,), 0.5 * math.pi, jnp.float32)])

    # theta = 2*pi*(gx*((2x+1)/w - 1) + gy*((2y+1)/h - 1)) + phase
    #       = x*A + y*B + C   with the constants below (built once, host-side).
    two_pi = 2.0 * math.pi
    a_col = (2.0 * two_pi / w) * gx
    b_col = (2.0 * two_pi / h) * gy
    c_col = phase + two_pi * gx * (1.0 / w - 1.0) + two_pi * gy * (1.0 / h - 1.0)
    consts = jnp.stack([a_col, b_col, c_col], axis=-1)             # (2F, 3)

    tile_p = _choose_tile(total)
    grid_n = pl.cdiv(total, tile_p)
    padded = grid_n * tile_p

    cost = pl.CostEstimate(
        flops=4 * c * padded,                 # 2 mul + 2 add per output element
        transcendentals=c * padded,           # one sin per output element
        bytes_accessed=4 * c * padded + 4 * consts.size)

    pe_flat = pl.pallas_call(
        functools.partial(_pe_kernel, w=w),
        out_shape=jax.ShapeDtypeStruct((c, padded), jnp.float32),
        grid=(grid_n,),
        in_specs=[pl.BlockSpec((c, 3), lambda i: (0, 0))],          # resident constants
        out_specs=pl.BlockSpec((c, tile_p), lambda i: (0, i)),      # lane-dense tiles
        compiler_params=pltpu.CompilerParams(
            dimension_semantics=("parallel",),
            vmem_limit_bytes=32 * 1024 * 1024),
        cost_estimate=cost,
    )(consts)

    if padded != total:
        pe_flat = pe_flat[:, :total]
    # (2F, H*W) -> (2F, H, W): identical memory layout, free reshape.
    return pe_flat.reshape(c, h, w)


def _reference(gaussian_matrix, size):
    """Pure-JAX reference mirroring the PyTorch module exactly."""
    h, w = size
    grid = jnp.ones((h, w), jnp.float32)
    y_embed = (jnp.cumsum(grid, axis=0) - 0.5) / h
    x_embed = (jnp.cumsum(grid, axis=1) - 0.5) / w
    coords = jnp.stack([x_embed, y_embed], axis=-1)          # (h, w, 2)
    coords = 2.0 * coords - 1.0
    coords = coords @ gaussian_matrix                        # (h, w, F)
    coords = 2.0 * jnp.pi * coords
    pe = jnp.concatenate([jnp.sin(coords), jnp.cos(coords)], axis=-1)
    return jnp.transpose(pe, (2, 0, 1))


if __name__ == "__main__":
    num_pos_feats = 64
    scale = 1.0  # PyTorch: scale=None -> 1.0
    h, w = 16, 16

    key = jax.random.PRNGKey(0)
    # Deterministic stand-in for scale * torch.randn((2, num_pos_feats)).
    gaussian_matrix = scale * jax.random.normal(key, (2, num_pos_feats), jnp.float32)

    pe = position_embedding_random(gaussian_matrix, (h, w))
    pe = jax.block_until_ready(pe)

    assert pe.shape == (2 * num_pos_feats, h, w), pe.shape
    assert pe.dtype == jnp.float32

    ref = jax.block_until_ready(_reference(gaussian_matrix, (h, w)))
    assert jnp.allclose(pe, ref, atol=5e-5, rtol=1e-5), float(jnp.max(jnp.abs(pe - ref)))

    print("KERNEL_OK")
</pallas_src>

<mosaic_0001>
module attributes {stable_mosaic.version = 11 : i64} {
  func.func @_pe_kernel(%arg0: i32, %arg1: memref<128x3xf32, #tpu.memory_space<vmem>>, %arg2: memref<128x128xf32, #tpu.memory_space<vmem>>) attributes {dimension_semantics = [#tpu.dimension_semantics<parallel>], iteration_bounds = array<i64: 2>, scalar_prefetch = 0 : i64, scratch_operands = 0 : i64, tpu.core_type = #tpu.core_type<tc>, window_params = [{pipeline_mode = #tpu.pipeline_mode<synchronous>, transform_indices = @transform_0, window_bounds = array<i64: 128, 3>}, {transform_indices = @transform_1, window_bounds = array<i64: 128, 128>}]} {
    %c128_i32 = arith.constant 128 : i32
    %0 = arith.muli %arg0, %c128_i32 : i32
    %1 = arith.sitofp %0 : i32 to f32
    %2 = tpu.iota {dimensions = array<i32: 1>} : vector<1x128xi32>
    %3 = arith.sitofp %2 : vector<1x128xi32> to vector<1x128xf32>
    %4 = vector.broadcast %1 : f32 to vector<1x128xf32>
    %5 = arith.addf %3, %4 : vector<1x128xf32>
    %cst = arith.constant 5.000000e-01 : f32
    %6 = vector.broadcast %cst : f32 to vector<1x128xf32>
    %7 = arith.addf %5, %6 : vector<1x128xf32>
    %cst_0 = arith.constant 1.600000e+01 : f32
    %8 = vector.broadcast %cst_0 : f32 to vector<1x128xf32>
    %9 = arith.divf %7, %8 : vector<1x128xf32>
    %10 = math.floor %9 : vector<1x128xf32>
    %cst_1 = arith.constant 1.600000e+01 : f32
    %11 = vector.broadcast %cst_1 : f32 to vector<1x128xf32>
    %12 = arith.mulf %10, %11 : vector<1x128xf32>
    %13 = arith.subf %5, %12 : vector<1x128xf32>
    %c0 = arith.constant 0 : index
    %c0_2 = arith.constant 0 : index
    %14 = vector.load %arg1[%c0, %c0_2] : memref<128x3xf32, #tpu.memory_space<vmem>>, vector<128x1xf32>
    %c0_3 = arith.constant 0 : index
    %c1 = arith.constant 1 : index
    %15 = vector.load %arg1[%c0_3, %c1] : memref<128x3xf32, #tpu.memory_space<vmem>>, vector<128x1xf32>
    %c0_4 = arith.constant 0 : index
    %c2 = arith.constant 2 : index
    %16 = vector.load %arg1[%c0_4, %c2] : memref<128x3xf32, #tpu.memory_space<vmem>>, vector<128x1xf32>
    %17 = vector.broadcast %13 : vector<1x128xf32> to vector<128x128xf32>
    %18 = vector.broadcast %14 : vector<128x1xf32> to vector<128x128xf32>
    %19 = arith.mulf %17, %18 : vector<128x128xf32>
    %20 = vector.broadcast %10 : vector<1x128xf32> to vector<128x128xf32>
    %21 = vector.broadcast %15 : vector<128x1xf32> to vector<128x128xf32>
    %22 = arith.mulf %20, %21 : vector<128x128xf32>
    %23 = arith.addf %19, %22 : vector<128x128xf32>
    %24 = vector.broadcast %16 : vector<128x1xf32> to vector<128x128xf32>
    %25 = arith.addf %23, %24 : vector<128x128xf32>
    %26 = math.sin %25 : vector<128x128xf32>
    %c0_5 = arith.constant 0 : index
    %c0_6 = arith.constant 0 : index
    %27 = vector.load %arg2[%c0_5, %c0_6] : memref<128x128xf32, #tpu.memory_space<vmem>>, vector<128x128xf32>
    tpu.vector_store %arg2[%c0_5, %c0_6], %26 {strides = array<i32>} : memref<128x128xf32, #tpu.memory_space<vmem>>, vector<128x128xf32>,
    return
  }
  func.func @transform_0(%arg0: i32) -> (i32, i32) {
    %c0_i32 = arith.constant 0 : i32
    %c0_i32_0 = arith.constant 0 : i32
    %c0_i32_1 = arith.constant 0 : i32
    return %c0_i32, %c0_i32_0 : i32, i32
  }
  func.func @transform_1(%arg0: i32) -> (i32, i32) {
    %c0_i32 = arith.constant 0 : i32
    %c0_i32_0 = arith.constant 0 : i32
    return %c0_i32, %arg0 : i32, i32
  }
}

</mosaic_0001>

<llo_original>
// kernel: tpu_custom_call.1
$region0: #{tpu_custom_call.1}
  #allocation0 [shape = 'u32[]', space=smem, size = 0x4, offset = 0x4, fixed_abs, tag = 'smem constant byte address 0x4 - core index']
  #allocation1 [shape = 'u32[144,128]{1,0:T(1,128)}', space=vmem, size = 0x12000, scoped, tag = 'internal scratch']
  %s0 = inlined_call_operand.vmem [shape: f32[128,3], index: 0, kind: input, shape index: {}]
  %s1 = inlined_call_operand.hbm [shape: f32[128,256], index: 1, kind: output, shape index: {}]
  %s2 = sld [smem:[#allocation0]]
  $region37: #{tpu_custom_call.1} parent=0
    _
  %s4 = ssub.s32 1, %s2
  %s5 = scalar_select 0, %s4, %s2
  $region1: #{tpu_custom_call.1} parent=0
    #allocation2 [shape = 'u8[131072]{0}', space=vmem, size = 0x20000, scoped, tag = 'output window, operand 0']
    #allocation3 [shape = 's32[2]{0}', space=sflag, size = 0x8, scoped, tag = 'scoped memory for tpu_custom_call.1']
    %6 = vsyncpa [#allocation3], 0
    %s7 = scalar_lea.sflag [#allocation3], 1
    %8 = vsyncpa %s7, 0
    loop: start=0, step=1, limit=4
    $region2: #{tpu_custom_call.1} parent=1 // loop_pre_header
      _
    $region3: #{tpu_custom_call.1} parent=1 // loop_header
      %s10 = sphi 0, %s14
      %p11 = scmp.ge.s32.totalorder %s10, 4
      %s18 = sphi 0, %s18
      %s20 = sphi 0, %s18
      %s21 = sphi 0, %s20
      %s35 = sphi 0, %s21
      %s41 = sphi 0, %s43
      %s44 = sphi 0, %s41
      %s45 = sphi 0, %s44
      %s61 = sphi 0, %s45
    $region4: #{tpu_custom_call.1} parent=1 // loop_header_branch
      %13 = sbr.rel (%p11) target = $region8
    $region5: #{tpu_custom_call.1} parent=1 // loop_body
      %s15 = ssub.s32 %s10, 1
      %s16 = ssub.s32 %s10, 2
      %s17 = sadd.s32 %s10, 1
      %s19 = sadd.s32 %s18, 1
      %p22 = scmp.eq.s32.totalorder %s10, 1
      %p23 = scmp.ne.s32.totalorder %s18, %s20
      %p24 = scmp.eq.s32.totalorder %s10, 0
      %p25 = por %p23, %p24
      %p26 = scmp.ne.s32.totalorder %s18, %s20
      %p27 = scmp.eq.s32.totalorder %s15, 1
      %p28 = por %p26, %p27
      %p29 = scmp.ne.s32.totalorder %s20, %s21
      %p30 = scmp.eq.s32.totalorder %s15, 0
      %p31 = por %p29, %p30
      %p32 = scmp.ne.s32.totalorder %s20, %s21
      %p33 = scmp.eq.s32.totalorder %s16, 1
      %p34 = por %p32, %p33
      %p36 = scmp.ne.s32.totalorder %s21, %s35
      %p37 = scmp.eq.s32.totalorder %s16, 0
      %p38 = por %p36, %p37
      %s39 = ssub.s32 %s10, %s17
      %p40 = scmp.eq.s32.totalorder %s39, 0
      %s42 = sadd.s32 %s41, 1
      %s43 = scalar_select %p40, %s41, %s42
      %p46 = pneg %p40
      %p47 = scmp.eq.s32.totalorder %s10, 1
      %p48 = por %p46, %p47
      %p49 = scmp.ne.s32.totalorder %s41, %s44
      %p50 = scmp.eq.s32.totalorder %s10, 0
      %p51 = por %p49, %p50
      %p52 = scmp.ne.s32.totalorder %s41, %s44
      %p53 = scmp.eq.s32.totalorder %s15, 1
      %p54 = por %p52, %p53
      %p55 = scmp.ne.s32.totalorder %s44, %s45
      %p56 = scmp.eq.s32.totalorder %s15, 0
      %p57 = por %p55, %p56
      %p58 = scmp.ne.s32.totalorder %s44, %s45
      %p59 = scmp.eq.s32.totalorder %s16, 1
      %p60 = por %p58, %p59
      %p62 = scmp.ne.s32.totalorder %s45, %s61
      %p63 = scmp.eq.s32.totalorder %s16, 0
      %p64 = por %p62, %p63
      %p65 = scmp.le.s32.totalorder 1, %s10
      %p66 = scmp.lt.s32.totalorder %s10, 3
      %p67 = pnand %p65, %p66
      %p68 = pneg %p67
      // Predicated region
      $region9: #{tpu_custom_call.1} parent=5 // pred_check
        _
      $region10: #{tpu_custom_call.1} parent=5 // pred_check_branch
        %70 = sbr.rel (%p67) target = $region12
      $region11: #{tpu_custom_call.1} parent=5 // pred_region
        %s71 = ssub.s32 %s10, 1
        // Predicated region
        $region13: #{tpu_custom_call.1} parent=11 // pred_check
          %p72 = pneg %p31
        $region14: #{tpu_custom_call.1} parent=11 // pred_check_branch
          %74 = sbr.rel (%p72) target = $region16
        $region15: #{tpu_custom_call.1} parent=11 // pred_region
          _
        $region16: #{tpu_custom_call.1} parent=11 // pred_fallthru
          _
      $region12: #{tpu_custom_call.1} parent=5 // pred_fallthru
        _
      %p75 = scmp.lt.s32.totalorder %s10, 2
      // Predicated region
      $region17: #{tpu_custom_call.1} parent=5 // pred_check
        %p76 = pneg %p75
      $region18: #{tpu_custom_call.1} parent=5 // pred_check_branch
        %78 = sbr.rel (%p76) target = $region20
      $region19: #{tpu_custom_call.1} parent=5 // pred_region
        _
      $region20: #{tpu_custom_call.1} parent=5 // pred_fallthru
        _
      %p79 = scmp.le.s32.totalorder 1, %s10
      %p80 = scmp.lt.s32.totalorder %s10, 3
      %p81 = pnand %p79, %p80
      %p82 = pneg %p81
      // Predicated region
      $region21: #{tpu_custom_call.1} parent=5 // pred_check
        _
      $region22: #{tpu_custom_call.1} parent=5 // pred_check_branch
        %84 = sbr.rel (%p81) target = $region24
      $region23: #{tpu_custom_call.1} parent=5 // pred_region
        %s85 = ssub.s32 %s10, 1
        %p86 = pneg %p31
        %p87 = pneg %p28
        %p88 = pneg %p57
        %p89 = pneg %p54
        %s90 = sand.u32 %s44, 1
        %s91 = scalar_lea.sflag [#allocation3], %s90
        %s92 = sand.u32 %s44, 1
        %s93 = smul.addr %s92, 128
        %s94 = scalar_lea.vmem [#allocation2], %s93
        %s95 = smul.u32 %s15, 128
        %s96 = scvt.s32.f32 %s95
        %v97 = vlaneseq
        %v98 = vand.u32 %v97, 127
        %v99 = vcvt.s32.f32 %v98
        %v100 = vstv %s96
        %v101 = vadd.f32 %v99, %v100
        %v102 = vadd.f32 %v101, 0.5
        %v103 = vrcp.pop 16.0
        %v104 = vmul.f32 %v102, %v103
        %v105 = vfloor.f32 %v104
        %v106 = vmul.f32 %v105, 16.0
        %v107 = vsub.f32 %v101, %v106
        %v108 = vld [vmem:[%s0] sm:$0xff]
        %v109 = vld [vmem:[%s0 + $0x8] sm:$0xff]
        %v110 = vld [vmem:[%s0 + $0x10] sm:$0xff]
        %v111 = vld [vmem:[%s0 + $0x18] sm:$0xff]
        %v112 = vld [vmem:[%s0 + $0x20] sm:$0xff]
        %v113 = vld [vmem:[%s0 + $0x28] sm:$0xff]
        %v114 = vld [vmem:[%s0 + $0x30] sm:$0xff]
        %v115 = vld [vmem:[%s0 + $0x38] sm:$0xff]
        %v116 = vld [vmem:[%s0 + $0x40] sm:$0xff]
        %v117 = vld [vmem:[%s0 + $0x48] sm:$0xff]
        %v118 = vld [vmem:[%s0 + $0x50] sm:$0xff]
        %v119 = vld [vmem:[%s0 + $0x58] sm:$0xff]
        %v120 = vld [vmem:[%s0 + $0x60] sm:$0xff]
        %v121 = vld [vmem:[%s0 + $0x68] sm:$0xff]
        %v122 = vld [vmem:[%s0 + $0x70] sm:$0xff]
        %v123 = vld [vmem:[%s0 + $0x78] sm:$0xff]
        %125 = vset.pattern.permute.xlu0 0
        %126 = vperm.xlu0 %125, %v108
        %v127 = vpop.permute.xlu0 %126
        %130 = vset.pattern.permute.xlu0 0
        %131 = vperm.xlu0 %130, %v109
        %v132 = vpop.permute.xlu0 %131
        %135 = vset.pattern.permute.xlu0 0
        %136 = vperm.xlu0 %135, %v110
        %v137 = vpop.permute.xlu0 %136
        %140 = vset.pattern.permute.xlu0 0
        %141 = vperm.xlu0 %140, %v111
        %v142 = vpop.permute.xlu0 %141
        %145 = vset.pattern.permute.xlu0 0
        %146 = vperm.xlu0 %145, %v112
        %v147 = vpop.permute.xlu0 %146
        %150 = vset.pattern.permute.xlu0 0
        %151 = vperm.xlu0 %150, %v113
        %v152 = vpop.permute.xlu0 %151
        %155 = vset.pattern.permute.xlu0 0
        %156 = vperm.xlu0 %155, %v114
        %v157 = vpop.permute.xlu0 %156
        %160 = vset.pattern.permute.xlu0 0
        %161 = vperm.xlu0 %160, %v115
        %v162 = vpop.permute.xlu0 %161
        %165 = vset.pattern.permute.xlu0 0
        %166 = vperm.xlu0 %165, %v116
        %v167 = vpop.permute.xlu0 %166
        %170 = vset.pattern.permute.xlu0 0
        %171 = vperm.xlu0 %170, %v117
        %v172 = vpop.permute.xlu0 %171
        %175 = vset.pattern.permute.xlu0 0
        %176 = vperm.xlu0 %175, %v118
        %v177 = vpop.permute.xlu0 %176
        %180 = vset.pattern.permute.xlu0 0
        %181 = vperm.xlu0 %180, %v119
        %v182 = vpop.permute.xlu0 %181
        %185 = vset.pattern.permute.xlu0 0
        %186 = vperm.xlu0 %185, %v120
        %v187 = vpop.permute.xlu0 %186
        %190 = vset.pattern.permute.xlu0 0
        %191 = vperm.xlu0 %190, %v121
        %v192 = vpop.permute.xlu0 %191
        %195 = vset.pattern.permute.xlu0 0
        %196 = vperm.xlu0 %195, %v122
        %v197 = vpop.permute.xlu0 %196
        %200 = vset.pattern.permute.xlu0 0
        %201 = vperm.xlu0 %200, %v123
        %v202 = vpop.permute.xlu0 %201
        %v204 = vmul.f32 %v107, %v127
        %v205 = vmul.f32 %v107, %v132
        %v206 = vmul.f32 %v107, %v137
        %v207 = vmul.f32 %v107, %v142
        %v208 = vmul.f32 %v107, %v147
        %v209 = vmul.f32 %v107, %v152
        %v210 = vmul.f32 %v107, %v157
        %v211 = vmul.f32 %v107, %v162
        %v212 = vmul.f32 %v107, %v167
        %v213 = vmul.f32 %v107, %v172
        %v214 = vmul.f32 %v107, %v177
        %v215 = vmul.f32 %v107, %v182
        %v216 = vmul.f32 %v107, %v187
        %v217 = vmul.f32 %v107, %v192
        %v218 = vmul.f32 %v107, %v197
        %v219 = vmul.f32 %v107, %v202
        %220 = vset.pattern.permute.xlu0 1
        %221 = vperm.xlu0 %220, %v108
        %v222 = vpop.permute.xlu0 %221
        %224 = vset.pattern.permute.xlu0 1
        %225 = vperm.xlu0 %224, %v109
        %v226 = vpop.permute.xlu0 %225
        %228 = vset.pattern.permute.xlu0 1
        %229 = vperm.xlu0 %228, %v110
        %v230 = vpop.permute.xlu0 %229
        %232 = vset.pattern.permute.xlu0 1
        %233 = vperm.xlu0 %232, %v111
        %v234 = vpop.permute.xlu0 %233
        %236 = vset.pattern.permute.xlu0 1
        %237 = vperm.xlu0 %236, %v112
        %v238 = vpop.permute.xlu0 %237
        %240 = vset.pattern.permute.xlu0 1
        %241 = vperm.xlu0 %240, %v113
        %v242 = vpop.permute.xlu0 %241
        %244 = vset.pattern.permute.xlu0 1
        %245 = vperm.xlu0 %244, %v114
        %v246 = vpop.permute.xlu0 %245
        %248 = vset.pattern.permute.xlu0 1
        %249 = vperm.xlu0 %248, %v115
        %v250 = vpop.permute.xlu0 %249
        %252 = vset.pattern.permute.xlu0 1
        %253 = vperm.xlu0 %252, %v116
        %v254 = vpop.permute.xlu0 %253
        %256 = vset.pattern.permute.xlu0 1
        %257 = vperm.xlu0 %256, %v117
        %v258 = vpop.permute.xlu0 %257
        %260 = vset.pattern.permute.xlu0 1
        %261 = vperm.xlu0 %260, %v118
        %v262 = vpop.permute.xlu0 %261
        %264 = vset.pattern.permute.xlu0 1
        %265 = vperm.xlu0 %264, %v119
        %v266 = vpop.permute.xlu0 %265
        %268 = vset.pattern.permute.xlu0 1
        %269 = vperm.xlu0 %268, %v120
        %v270 = vpop.permute.xlu0 %269
        %272 = vset.pattern.permute.xlu0 1
        %273 = vperm.xlu0 %272, %v121
        %v274 = vpop.permute.xlu0 %273
        %276 = vset.pattern.permute.xlu0 1
        %277 = vperm.xlu0 %276, %v122
        %v278 = vpop.permute.xlu0 %277
        %280 = vset.pattern.permute.xlu0 1
        %281 = vperm.xlu0 %280, %v123
        %v282 = vpop.permute.xlu0 %281
        %v284 = vmul.f32 %v105, %v222
        %v285 = vmul.f32 %v105, %v226
        %v286 = vmul.f32 %v105, %v230
        %v287 = vmul.f32 %v105, %v234
        %v288 = vmul.f32 %v105, %v238
        %v289 = vmul.f32 %v105, %v242
        %v290 = vmul.f32 %v105, %v246
        %v291 = vmul.f32 %v105, %v250
        %v292 = vmul.f32 %v105, %v254
        %v293 = vmul.f32 %v105, %v258
        %v294 = vmul.f32 %v105, %v262
        %v295 = vmul.f32 %v105, %v266
        %v296 = vmul.f32 %v105, %v270
        %v297 = vmul.f32 %v105, %v274
        %v298 = vmul.f32 %v105, %v278
        %v299 = vmul.f32 %v105, %v282
        %v300 = vadd.f32 %v204, %v284
        %v301 = vadd.f32 %v205, %v285
        %v302 = vadd.f32 %v206, %v286
        %v303 = vadd.f32 %v207, %v287
        %v304 = vadd.f32 %v208, %v288
        %v305 = vadd.f32 %v209, %v289
        %v306 = vadd.f32 %v210, %v290
        %v307 = vadd.f32 %v211, %v291
        %v308 = vadd.f32 %v212, %v292
        %v309 = vadd.f32 %v213, %v293
        %v310 = vadd.f32 %v214, %v294
        %v311 = vadd.f32 %v215, %v295
        %v312 = vadd.f32 %v216, %v296
        %v313 = vadd.f32 %v217, %v297
        %v314 = vadd.f32 %v218, %v298
        %v315 = vadd.f32 %v219, %v299
        %316 = vset.pattern.permute.xlu0 2
        %317 = vperm.xlu0 %316, %v108
        %v318 = vpop.permute.xlu0 %317
        %320 = vset.pattern.permute.xlu0 2
        %321 = vperm.xlu0 %320, %v109
        %v322 = vpop.permute.xlu0 %321
        %324 = vset.pattern.permute.xlu0 2
        %325 = vperm.xlu0 %324, %v110
        %v326 = vpop.permute.xlu0 %325
        %328 = vset.pattern.permute.xlu0 2
        %329 = vperm.xlu0 %328, %v111
        %v330 = vpop.permute.xlu0 %329
        %332 = vset.pattern.permute.xlu0 2
        %333 = vperm.xlu0 %332, %v112
        %v334 = vpop.permute.xlu0 %333
        %336 = vset.pattern.permute.xlu0 2
        %337 = vperm.xlu0 %336, %v113
        %v338 = vpop.permute.xlu0 %337
        %340 = vset.pattern.permute.xlu0 2
        %341 = vperm.xlu0 %340, %v114
        %v342 = vpop.permute.xlu0 %341
        %344 = vset.pattern.permute.xlu0 2
        %345 = vperm.xlu0 %344, %v115
        %v346 = vpop.permute.xlu0 %345
        %348 = vset.pattern.permute.xlu0 2
        %349 = vperm.xlu0 %348, %v116
        %v350 = vpop.permute.xlu0 %349
        %352 = vset.pattern.permute.xlu0 2
        %353 = vperm.xlu0 %352, %v117
        %v354 = vpop.permute.xlu0 %353
        %356 = vset.pattern.permute.xlu0 2
        %357 = vperm.xlu0 %356, %v118
        %v358 = vpop.permute.xlu0 %357
        %360 = vset.pattern.permute.xlu0 2
        %361 = vperm.xlu0 %360, %v119
        %v362 = vpop.permute.xlu0 %361
        %364 = vset.pattern.permute.xlu0 2
        %365 = vperm.xlu0 %364, %v120
        %v366 = vpop.permute.xlu0 %365
        %368 = vset.pattern.permute.xlu0 2
        %369 = vperm.xlu0 %368, %v121
        %v370 = vpop.permute.xlu0 %369
        %372 = vset.pattern.permute.xlu0 2
        %373 = vperm.xlu0 %372, %v122
        %v374 = vpop.permute.xlu0 %373
        %376 = vset.pattern.permute.xlu0 2
        %377 = vperm.xlu0 %376, %v123
        %v378 = vpop.permute.xlu0 %377
        %v380 = vadd.f32 %v300, %v318
        %v381 = vadd.f32 %v301, %v322
        %v382 = vadd.f32 %v302, %v326
        %v383 = vadd.f32 %v303, %v330
        %v384 = vadd.f32 %v304, %v334
        %v385 = vadd.f32 %v305, %v338
        %v386 = vadd.f32 %v306, %v342
        %v387 = vadd.f32 %v307, %v346
        %v388 = vadd.f32 %v308, %v350
        %v389 = vadd.f32 %v309, %v354
        %v390 = vadd.f32 %v310, %v358
        %v391 = vadd.f32 %v311, %v362
        %v392 = vadd.f32 %v312, %v366
        %v393 = vadd.f32 %v313, %v370
        %v394 = vadd.f32 %v314, %v374
        %v395 = vadd.f32 %v315, %v378
        %v396 = vand.u32 2147483647, %v380
        %vm397 = vcmp.le.f32.partialorder %v396, 0.7853982
        %vm398 = vcmp.lt.s32.totalorder %v380, 0
        %v399 = vand.u32 %v380, 2139095040
        %v400 = vshrl.u32 %v399, 23
        %v401 = vsub.s32 %v400, 127
        %v402 = vand.u32 2147483647, %v380
        %v403 = vand.u32 %v402, 8388607
        %v404 = vor.u32 %v403, 8388608
        %v405 = vsub.s32 0, %v404
        %v406 = vadd.s32 %v401, 1
        %vm407 = vcmp.gt.s32.totalorder %v406, 0
        %v408 = vsel %vm407, %v406, 0
        %v409 = vshrl.u32 %v408, 5
        %v410 = vand.u32 %v408, 31
        %v411 = vsub.s32 32, %v410
        %v412 = vshrl.u32 683565275, %v411
        %v413 = vshll.u32 683565275, %v410
        %v414 = vshrl.u32 2475754826, %v411
        %v415 = vor.u32 %v413, %v414
        %v416 = vshll.u32 2475754826, %v410
        %v417 = vshrl.u32 2131351028, %v411
        %v418 = vor.u32 %v416, %v417
        %v419 = vshll.u32 2131351028, %v410
        %v420 = vshrl.u32 2102212464, %v411
        %v421 = vor.u32 %v419, %v420
        %v422 = vshll.u32 2102212464, %v410
        %v423 = vshrl.u32 920167782, %v411
        %v424 = vor.u32 %v422, %v423
        %v425 = vshll.u32 920167782, %v410
        %v426 = vshrl.u32 1326507024, %v411
        %v427 = vor.u32 %v425, %v426
        %vm428 = vcmp.lt.s32.totalorder %v409, 1
        %vm429 = vcmp.lt.s32.totalorder %v409, 2
        %vm430 = vcmp.lt.s32.totalorder %v409, 3
        %vm431 = vcmp.lt.s32.totalorder %v409, 4
        %v432 = vsel %vm428, %v412, %v415
        %v433 = vsel %vm431, %v421, 2102212464
        %v434 = vsel %vm430, %v418, %v433
        %v435 = vsel %vm429, %v432, %v434
        %v436 = vsel %vm428, %v415, %v418
        %v437 = vsel %vm431, %v424, 920167782
        %v438 = vsel %vm430, %v421, %v437
        %v439 = vsel %vm429, %v436, %v438
        %v440 = vsel %vm428, %v418, %v421
        %v441 = vsel %vm431, %v427, 1326507024
        %v442 = vsel %vm430, %v424, %v441
        %v443 = vsel %vm429, %v440, %v442
        %v444 = vshll.u32 %v404, 8
        %v445 = vmul.u32.u64.compose %v444, %v443
        %v446 = vextract.low.u32 %v445
        %v447 = vextract.high.u32 %v445
        %v448 = vmul.u32.u64.compose %v444, %v439
        %v449 = vextract.low.u32 %v448
        %v450 = vextract.high.u32 %v448
        %v451 = vmul.u32 %v444, %v435
        %v452 = vadd.s32 %v447, %v449
        %vm453 = vc.u32 %v447, %v449
        %v454 = vadd.s32 %v450, 1
        %v455 = vsel %vm453, %v454, %v450
        %v456 = vadd.s32 %v451, %v455
        %v457 = vadd.s32 %v456, 536870912
        %v458 = vshrl.u32 %v457, 30
        %v459 = vshll.u32 %v458, 30
        %v460 = vsub.s32 %v456, %v459
        %vm461 = vcmp.lt.s32.totalorder %v460, 0
        %v462 = vsub.s32 0, %v460
        %v463 = vsel %vm461, %v462, %v460
        %v464 = vclz %v463
        %v465 = vsub.s32 %v464, 2
        %vm466 = vcmp.gt.s32.totalorder 0, %v465
        %v467 = vsel %vm466, 0, %v465
        %v468 = vsub.s32 32, %v467
        %v469 = vshll.u32 %v460, %v467
        %v470 = vshrl.u32 %v452, %v468
        %v471 = vor.u32 %v469, %v470
        %v472 = vsub.s32 4294967266, %v467
        %v473 = vadd.s32 %v472, 127
        %v474 = vshll.u32 %v473, 23
        %v475 = vor.u32 4788187, %v474
        %v476 = vand.u32 2147483647, %v475
        %v478 = vcvt.s32.f32 %v471
        %v479 = vmul.f32 %v478, %v476
        %v480 = vxor.u32 %v479, 2147483648
        %v481 = vsel %vm398, %v480, %v479
        %v482 = vsub.s32 4, %v458
        %v483 = vsel %vm398, %v482, %v458
        %v484 = vsel %vm397, %v380, %v481
        %v485 = vsel %vm397, 0, %v483
        %v486 = vcosq.f32.pop %v484
        %v487 = vsinq.f32.pop %v484
        %vm488 = vweird.f32 %v380
        %v489 = vadd.s32 %v485, 3
        %v490 = vand.u32 %v489, 3
        %vm491 = vcmp.lt.s32.totalorder %v490, 2
        %vm492 = vcmp.eq.s32.totalorder %v490, 0
        %v493 = vxor.u32 %v487, 2147483648
        %v494 = vsel %vm492, %v486, %v493
        %vm495 = vcmp.eq.s32.totalorder %v490, 2
        %v496 = vxor.u32 %v486, 2147483648
        %v497 = vsel %vm495, %v496, %v487
        %v498 = vsel %vm491, %v494, %v497
        %v499 = vsel %vm488, nan, %v498
        %v500 = vand.u32 2147483647, %v381
        %vm501 = vcmp.le.f32.partialorder %v500, 0.7853982
        %vm502 = vcmp.lt.s32.totalorder %v381, 0
        %v503 = vand.u32 %v381, 2139095040
        %v504 = vshrl.u32 %v503, 23
        %v505 = vsub.s32 %v504, 127
        %v506 = vand.u32 2147483647, %v381
        %v507 = vand.u32 %v506, 8388607
        %v508 = vor.u32 %v507, 8388608
        %v509 = vsub.s32 0, %v508
        %v510 = vadd.s32 %v505, 1
        %vm511 = vcmp.gt.s32.totalorder %v510, 0
        %v512 = vsel %vm511, %v510, 0
        %v513 = vshrl.u32 %v512, 5
        %v514 = vand.u32 %v512, 31
        %v515 = vsub.s32 32, %v514
        %v516 = vshrl.u32 683565275, %v515
        %v517 = vshll.u32 683565275, %v514
        %v518 = vshrl.u32 2475754826, %v515
        %v519 = vor.u32 %v517, %v518
        %v520 = vshll.u32 2475754826, %v514
        %v521 = vshrl.u32 2131351028, %v515
        %v522 = vor.u32 %v520, %v521
        %v523 = vshll.u32 2131351028, %v514
        %v524 = vshrl.u32 2102212464, %v515
        %v525 = vor.u32 %v523, %v524
        %v526 = vshll.u32 2102212464, %v514
        %v527 = vshrl.u32 920167782, %v515
        %v528 = vor.u32 %v526, %v527
        %v529 = vshll.u32 920167782, %v514
        %v530 = vshrl.u32 1326507024, %v515
        %v531 = vor.u32 %v529, %v530
        %vm532 = vcmp.lt.s32.totalorder %v513, 1
        %vm533 = vcmp.lt.s32.totalorder %v513, 2
        %vm534 = vcmp.lt.s32.totalorder %v513, 3
        %vm535 = vcmp.lt.s32.totalorder %v513, 4
        %v536 = vsel %vm532, %v516, %v519
        %v537 = vsel %vm535, %v525, 2102212464
        %v538 = vsel %vm534, %v522, %v537
        %v539 = vsel %vm533, %v536, %v538
        %v540 = vsel %vm532, %v519, %v522
        %v541 = vsel %vm535, %v528, 920167782
        %v542 = vsel %vm534, %v525, %v541
        %v543 = vsel %vm533, %v540, %v542
        %v544 = vsel %vm532, %v522, %v525
        %v545 = vsel %vm535, %v531, 1326507024
        %v546 = vsel %vm534, %v528, %v545
        %v547 = vsel %vm533, %v544, %v546
        %v548 = vshll.u32 %v508, 8
        %v549 = vmul.u32.u64.compose %v548, %v547
        %v550 = vextract.low.u32 %v549
        %v551 = vextract.high.u32 %v549
        %v552 = vmul.u32.u64.compose %v548, %v543
        %v553 = vextract.low.u32 %v552
        %v554 = vextract.high.u32 %v552
        %v555 = vmul.u32 %v548, %v539
        %v556 = vadd.s32 %v551, %v553
        %vm557 = vc.u32 %v551, %v553
        %v558 = vadd.s32 %v554, 1
        %v559 = vsel %vm557, %v558, %v554
        %v560 = vadd.s32 %v555, %v559
        %v561 = vadd.s32 %v560, 536870912
        %v562 = vshrl.u32 %v561, 30
        %v563 = vshll.u32 %v562, 30
        %v564 = vsub.s32 %v560, %v563
        %vm565 = vcmp.lt.s32.totalorder %v564, 0
        %v566 = vsub.s32 0, %v564
        %v567 = vsel %vm565, %v566, %v564
        %v568 = vclz %v567
        %v569 = vsub.s32 %v568, 2
        %vm570 = vcmp.gt.s32.totalorder 0, %v569
        %v571 = vsel %vm570, 0, %v569
        %v572 = vsub.s32 32, %v571
        %v573 = vshll.u32 %v564, %v571
        %v574 = vshrl.u32 %v556, %v572
        %v575 = vor.u32 %v573, %v574
        %v576 = vsub.s32 4294967266, %v571
        %v577 = vadd.s32 %v576, 127
        %v578 = vshll.u32 %v577, 23
        %v579 = vor.u32 4788187, %v578
        %v580 = vand.u32 2147483647, %v579
        %v582 = vcvt.s32.f32 %v575
        %v583 = vmul.f32 %v582, %v580
        %v584 = vxor.u32 %v583, 2147483648
        %v585 = vsel %vm502, %v584, %v583
        %v586 = vsub.s32 4, %v562
        %v587 = vsel %vm502, %v586, %v562
        %v588 = vsel %vm501, %v381, %v585
        %v589 = vsel %vm501, 0, %v587
        %v590 = vcosq.f32.pop %v588
        %v591 = vsinq.f32.pop %v588
        %vm592 = vweird.f32 %v381
        %v593 = vadd.s32 %v589, 3
        %v594 = vand.u32 %v593, 3
        %vm595 = vcmp.lt.s32.totalorder %v594, 2
        %vm596 = vcmp.eq.s32.totalorder %v594, 0
        %v597 = vxor.u32 %v591, 2147483648
        %v598 = vsel %vm596, %v590, %v597
        %vm599 = vcmp.eq.s32.totalorder %v594, 2
        %v600 = vxor.u32 %v590, 2147483648
        %v601 = vsel %vm599, %v600, %v591
        %v602 = vsel %vm595, %v598, %v601
        %v603 = vsel %vm592, nan, %v602
        %v604 = vand.u32 2147483647, %v382
        %vm605 = vcmp.le.f32.partialorder %v604, 0.7853982
        %vm606 = vcmp.lt.s32.totalorder %v382, 0
        %v607 = vand.u32 %v382, 2139095040
        %v608 = vshrl.u32 %v607, 23
        %v609 = vsub.s32 %v608, 127
        %v610 = vand.u32 2147483647, %v382
        %v611 = vand.u32 %v610, 8388607
        %v612 = vor.u32 %v611, 8388608
        %v613 = vsub.s32 0, %v612
        %v614 = vadd.s32 %v609, 1
        %vm615 = vcmp.gt.s32.totalorder %v614, 0
        %v616 = vsel %vm615, %v614, 0
        %v617 = vshrl.u32 %v616, 5
        %v618 = vand.u32 %v616, 31
        %v619 = vsub.s32 32, %v618
        %v620 = vshrl.u32 683565275, %v619
        %v621 = vshll.u32 683565275, %v618
        %v622 = vshrl.u32 2475754826, %v619
        %v623 = vor.u32 %v621, %v622
        %v624 = vshll.u32 2475754826, %v618
        %v625 = vshrl.u32 2131351028, %v619
        %v626 = vor.u32 %v624, %v625
        %v627 = vshll.u32 2131351028, %v618
        %v628 = vshrl.u32 2102212464, %v619
        %v629 = vor.u32 %v627, %v628
        %v630 = vshll.u32 2102212464, %v618
        %v631 = vshrl.u32 920167782, %v619
        %v632 = vor.u32 %v630, %v631
        %v633 = vshll.u32 920167782, %v618
        %v634 = vshrl.u32 1326507024, %v619
        %v635 = vor.u32 %v633, %v634
        %vm636 = vcmp.lt.s32.totalorder %v617, 1
        %vm637 = vcmp.lt.s32.totalorder %v617, 2
        %vm638 = vcmp.lt.s32.totalorder %v617, 3
        %vm639 = vcmp.lt.s32.totalorder %v617, 4
        %v640 = vsel %vm636, %v620, %v623
        %v641 = vsel %vm639, %v629, 2102212464
        %v642 = vsel %vm638, %v626, %v641
        %v643 = vsel %vm637, %v640, %v642
        %v644 = vsel %vm636, %v623, %v626
        %v645 = vsel %vm639, %v632, 920167782
        %v646 = vsel %vm638, %v629, %v645
        %v647 = vsel %vm637, %v644, %v646
        %v648 = vsel %vm636, %v626, %v629
        %v649 = vsel %vm639, %v635, 1326507024
        %v650 = vsel %vm638, %v632, %v649
        %v651 = vsel %vm637, %v648, %v650
        %v652 = vshll.u32 %v612, 8
        %v653 = vmul.u32.u64.compose %v652, %v651
        %v654 = vextract.low.u32 %v653
        %v655 = vextract.high.u32 %v653
        %v656 = vmul.u32.u64.compose %v652, %v647
        %v657 = vextract.low.u32 %v656
        %v658 = vextract.high.u32 %v656
        %v659 = vmul.u32 %v652, %v643
        %v660 = vadd.s32 %v655, %v657
        %vm661 = vc.u32 %v655, %v657
        %v662 = vadd.s32 %v658, 1
        %v663 = vsel %vm661, %v662, %v658
        %v664 = vadd.s32 %v659, %v663
        %v665 = vadd.s32 %v664, 536870912
        %v666 = vshrl.u32 %v665, 30
        %v667 = vshll.u32 %v666, 30
        %v668 = vsub.s32 %v664, %v667
        %vm669 = vcmp.lt.s32.totalorder %v668, 0
        %v670 = vsub.s32 0, %v668
        %v671 = vsel %vm669, %v670, %v668
        %v672 = vclz %v671
        %v673 = vsub.s32 %v672, 2
        %vm674 = vcmp.gt.s32.totalorder 0, %v673
        %v675 = vsel %vm674, 0, %v673
        %v676 = vsub.s32 32, %v675
        %v677 = vshll.u32 %v668, %v675
        %v678 = vshrl.u32 %v660, %v676
        %v679 = vor.u32 %v677, %v678
        %v680 = vsub.s32 4294967266, %v675
        %v681 = vadd.s32 %v680, 127
        %v682 = vshll.u32 %v681, 23
        %v683 = vor.u32 4788187, %v682
        %v684 = vand.u32 2147483647, %v683
        %v686 = vcvt.s32.f32 %v679
        %v687 = vmul.f32 %v686, %v684
        %v688 = vxor.u32 %v687, 2147483648
        %v689 = vsel %vm606, %v688, %v687
        %v690 = vsub.s32 4, %v666
        %v691 = vsel %vm606, %v690, %v666
        %v692 = vsel %vm605, %v382, %v689
        %v693 = vsel %vm605, 0, %v691
        %v694 = vcosq.f32.pop %v692
        %v695 = vsinq.f32.pop %v692
        %vm696 = vweird.f32 %v382
        %v697 = vadd.s32 %v693, 3
        %v698 = vand.u32 %v697, 3
        %vm699 = vcmp.lt.s32.totalorder %v698, 2
        %vm700 = vcmp.eq.s32.totalorder %v698, 0
        %v701 = vxor.u32 %v695, 2147483648
        %v702 = vsel %vm700, %v694, %v701
        %vm703 = vcmp.eq.s32.totalorder %v698, 2
        %v704 = vxor.u32 %v694, 2147483648
        %v705 = vsel %vm703, %v704, %v695
        %v706 = vsel %vm699, %v702, %v705
        %v707 = vsel %vm696, nan, %v706
        %v708 = vand.u32 2147483647, %v383
        %vm709 = vcmp.le.f32.partialorder %v708, 0.7853982
        %vm710 = vcmp.lt.s32.totalorder %v383, 0
        %v711 = vand.u32 %v383, 2139095040
        %v712 = vshrl.u32 %v711, 23
        %v713 = vsub.s32 %v712, 127
        %v714 = vand.u32 2147483647, %v383
        %v715 = vand.u32 %v714, 8388607
        %v716 = vor.u32 %v715, 8388608
        %v717 = vsub.s32 0, %v716
        %v718 = vadd.s32 %v713, 1
        %vm719 = vcmp.gt.s32.totalorder %v718, 0
        %v720 = vsel %vm719, %v718, 0
        %v721 = vshrl.u32 %v720, 5
        %v722 = vand.u32 %v720, 31
        %v723 = vsub.s32 32, %v722
        %v724 = vshrl.u32 683565275, %v723
        %v725 = vshll.u32 683565275, %v722
        %v726 = vshrl.u32 2475754826, %v723
        %v727 = vor.u32 %v725, %v726
        %v728 = vshll.u32 2475754826, %v722
        %v729 = vshrl.u32 2131351028, %v723
        %v730 = vor.u32 %v728, %v729
        %v731 = vshll.u32 2131351028, %v722
        %v732 = vshrl.u32 2102212464, %v723
        %v733 = vor.u32 %v731, %v732
        %v734 = vshll.u32 2102212464, %v722
        %v735 = vshrl.u32 920167782, %v723
        %v736 = vor.u32 %v734, %v735
        %v737 = vshll.u32 920167782, %v722
        %v738 = vshrl.u32 1326507024, %v723
        %v739 = vor.u32 %v737, %v738
        %vm740 = vcmp.lt.s32.totalorder %v721, 1
        %vm741 = vcmp.lt.s32.totalorder %v721, 2
        %vm742 = vcmp.lt.s32.totalorder %v721, 3
        %vm743 = vcmp.lt.s32.totalorder %v721, 4
        %v744 = vsel %vm740, %v724, %v727
        %v745 = vsel %vm743, %v733, 2102212464
        %v746 = vsel %vm742, %v730, %v745
        %v747 = vsel %vm741, %v744, %v746
        %v748 = vsel %vm740, %v727, %v730
        %v749 = vsel %vm743, %v736, 920167782
        %v750 = vsel %vm742, %v733, %v749
        %v751 = vsel %vm741, %v748, %v750
        %v752 = vsel %vm740, %v730, %v733
        %v753 = vsel %vm743, %v739, 1326507024
        %v754 = vsel %vm742, %v736, %v753
        %v755 = vsel %vm741, %v752, %v754
        %v756 = vshll.u32 %v716, 8
        %v757 = vmul.u32.u64.compose %v756, %v755
        %v758 = vextract.low.u32 %v757
        %v759 = vextract.high.u32 %v757
        %v760 = vmul.u32.u64.compose %v756, %v751
        %v761 = vextract.low.u32 %v760
        %v762 = vextract.high.u32 %v760
        %v763 = vmul.u32 %v756, %v747
        %v764 = vadd.s32 %v759, %v761
        %vm765 = vc.u32 %v759, %v761
        %v766 = vadd.s32 %v762, 1
        %v767 = vsel %vm765, %v766, %v762
        %v768 = vadd.s32 %v763, %v767
        %v769 = vadd.s32 %v768, 536870912
        %v770 = vshrl.u32 %v769, 30
        %v771 = vshll.u32 %v770, 30
        %v772 = vsub.s32 %v768, %v771
        %vm773 = vcmp.lt.s32.totalorder %v772, 0
        %v774 = vsub.s32 0, %v772
        %v775 = vsel %vm773, %v774, %v772
        %v776 = vclz %v775
        %v777 = vsub.s32 %v776, 2
        %vm778 = vcmp.gt.s32.totalorder 0, %v777
        %v779 = vsel %vm778, 0, %v777
        %v780 = vsub.s32 32, %v779
        %v781 = vshll.u32 %v772, %v779
        %v782 = vshrl.u32 %v764, %v780
        %v783 = vor.u32 %v781, %v782
        %v784 = vsub.s32 4294967266, %v779
        %v785 = vadd.s32 %v784, 127
        %v786 = vshll.u32 %v785, 23
        %v787 = vor.u32 4788187, %v786
        %v788 = vand.u32 2147483647, %v787
        %v790 = vcvt.s32.f32 %v783
        %v791 = vmul.f32 %v790, %v788
        %v792 = vxor.u32 %v791, 2147483648
        %v793 = vsel %vm710, %v792, %v791
        %v794 = vsub.s32 4, %v770
        %v795 = vsel %vm710, %v794, %v770
        %v796 = vsel %vm709, %v383, %v793
        %v797 = vsel %vm709, 0, %v795
        %v798 = vcosq.f32.pop %v796
        %v799 = vsinq.f32.pop %v796
        %vm800 = vweird.f32 %v383
        %v801 = vadd.s32 %v797, 3
        %v802 = vand.u32 %v801, 3
        %vm803 = vcmp.lt.s32.totalorder %v802, 2
        %vm804 = vcmp.eq.s32.totalorder %v802, 0
        %v805 = vxor.u32 %v799, 2147483648
        %v806 = vsel %vm804, %v798, %v805
        %vm807 = vcmp.eq.s32.totalorder %v802, 2
        %v808 = vxor.u32 %v798, 2147483648
        %v809 = vsel %vm807, %v808, %v799
        %v810 = vsel %vm803, %v806, %v809
        %v811 = vsel %vm800, nan, %v810
        %v812 = vand.u32 2147483647, %v384
        %vm813 = vcmp.le.f32.partialorder %v812, 0.7853982
        %vm814 = vcmp.lt.s32.totalorder %v384, 0
        %v815 = vand.u32 %v384, 2139095040
        %v816 = vshrl.u32 %v815, 23
        %v817 = vsub.s32 %v816, 127
        %v818 = vand.u32 2147483647, %v384
        %v819 = vand.u32 %v818, 8388607
        %v820 = vor.u32 %v819, 8388608
        %v821 = vsub.s32 0, %v820
        %v822 = vadd.s32 %v817, 1
        %vm823 = vcmp.gt.s32.totalorder %v822, 0
        %v824 = vsel %vm823, %v822, 0
        %v825 = vshrl.u32 %v824, 5
        %v826 = vand.u32 %v824, 31
        %v827 = vsub.s32 32, %v826
        %v828 = vshrl.u32 683565275, %v827
        %v829 = vshll.u32 683565275, %v826
        %v830 = vshrl.u32 2475754826, %v827
        %v831 = vor.u32 %v829, %v830
        %v832 = vshll.u32 2475754826, %v826
        %v833 = vshrl.u32 2131351028, %v827
        %v834 = vor.u32 %v832, %v833
        %v835 = vshll.u32 2131351028, %v826
        %v836 = vshrl.u32 2102212464, %v827
        %v837 = vor.u32 %v835, %v836
        %v838 = vshll.u32 2102212464, %v826
        %v839 = vshrl.u32 920167782, %v827
        %v840 = vor.u32 %v838, %v839
        %v841 = vshll.u32 920167782, %v826
        %v842 = vshrl.u32 1326507024, %v827
        %v843 = vor.u32 %v841, %v842
        %vm844 = vcmp.lt.s32.totalorder %v825, 1
        %vm845 = vcmp.lt.s32.totalorder %v825, 2
        %vm846 = vcmp.lt.s32.totalorder %v825, 3
        %vm847 = vcmp.lt.s32.totalorder %v825, 4
        %v848 = vsel %vm844, %v828, %v831
        %v849 = vsel %vm847, %v837, 2102212464
        %v850 = vsel %vm846, %v834, %v849
        %v851 = vsel %vm845, %v848, %v850
        %v852 = vsel %vm844, %v831, %v834
        %v853 = vsel %vm847, %v840, 920167782
        %v854 = vsel %vm846, %v837, %v853
        %v855 = vsel %vm845, %v852, %v854
        %v856 = vsel %vm844, %v834, %v837
        %v857 = vsel %vm847, %v843, 1326507024
        %v858 = vsel %vm846, %v840, %v857
        %v859 = vsel %vm845, %v856, %v858
        %v860 = vshll.u32 %v820, 8
        %v861 = vmul.u32.u64.compose %v860, %v859
        %v862 = vextract.low.u32 %v861
        %v863 = vextract.high.u32 %v861
        %v864 = vmul.u32.u64.compose %v860, %v855
        %v865 = vextract.low.u32 %v864
        %v866 = vextract.high.u32 %v864
        %v867 = vmul.u32 %v860, %v851
        %v868 = vadd.s32 %v863, %v865
        %vm869 = vc.u32 %v863, %v865
        %v870 = vadd.s32 %v866, 1
        %v871 = vsel %vm869, %v870, %v866
        %v872 = vadd.s32 %v867, %v871
        %v873 = vadd.s32 %v872, 536870912
        %v874 = vshrl.u32 %v873, 30
        %v875 = vshll.u32 %v874, 30
        %v876 = vsub.s32 %v872, %v875
        %vm877 = vcmp.lt.s32.totalorder %v876, 0
        %v878 = vsub.s32 0, %v876
        %v879 = vsel %vm877, %v878, %v876
        %v880 = vclz %v879
        %v881 = vsub.s32 %v880, 2
        %vm882 = vcmp.gt.s32.totalorder 0, %v881
        %v883 = vsel %vm882, 0, %v881
        %v884 = vsub.s32 32, %v883
        %v885 = vshll.u32 %v876, %v883
        %v886 = vshrl.u32 %v868, %v884
        %v887 = vor.u32 %v885, %v886
        %v888 = vsub.s32 4294967266, %v883
        %v889 = vadd.s32 %v888, 127
        %v890 = vshll.u32 %v889, 23
        %v891 = vor.u32 4788187, %v890
        %v892 = vand.u32 2147483647, %v891
        %v894 = vcvt.s32.f32 %v887
        %v895 = vmul.f32 %v894, %v892
        %v896 = vxor.u32 %v895, 2147483648
        %v897 = vsel %vm814, %v896, %v895
        %v898 = vsub.s32 4, %v874
        %v899 = vsel %vm814, %v898, %v874
        %v900 = vsel %vm813, %v384, %v897
        %v901 = vsel %vm813, 0, %v899
        %v902 = vcosq.f32.pop %v900
        %v903 = vsinq.f32.pop %v900
        %vm904 = vweird.f32 %v384
        %v905 = vadd.s32 %v901, 3
        %v906 = vand.u32 %v905, 3
        %vm907 = vcmp.lt.s32.totalorder %v906, 2
        %vm908 = vcmp.eq.s32.totalorder %v906, 0
        %v909 = vxor.u32 %v903, 2147483648
        %v910 = vsel %vm908, %v902, %v909
        %vm911 = vcmp.eq.s32.totalorder %v906, 2
        %v912 = vxor.u32 %v902, 2147483648
        %v913 = vsel %vm911, %v912, %v903
        %v914 = vsel %vm907, %v910, %v913
        %v915 = vsel %vm904, nan, %v914
        %v916 = vand.u32 2147483647, %v385
        %vm917 = vcmp.le.f32.partialorder %v916, 0.7853982
        %vm918 = vcmp.lt.s32.totalorder %v385, 0
        %v919 = vand.u32 %v385, 2139095040
        %v920 = vshrl.u32 %v919, 23
        %v921 = vsub.s32 %v920, 127
        %v922 = vand.u32 2147483647, %v385
        %v923 = vand.u32 %v922, 8388607
        %v924 = vor.u32 %v923, 8388608
        %v925 = vsub.s32 0, %v924
        %v926 = vadd.s32 %v921, 1
        %vm927 = vcmp.gt.s32.totalorder %v926, 0
        %v928 = vsel %vm927, %v926, 0
        %v929 = vshrl.u32 %v928, 5
        %v930 = vand.u32 %v928, 31
        %v931 = vsub.s32 32, %v930
        %v932 = vshrl.u32 683565275, %v931
        %v933 = vshll.u32 683565275, %v930
        %v934 = vshrl.u32 2475754826, %v931
        %v935 = vor.u32 %v933, %v934
        %v936 = vshll.u32 2475754826, %v930
        %v937 = vshrl.u32 2131351028, %v931
        %v938 = vor.u32 %v936, %v937
        %v939 = vshll.u32 2131351028, %v930
        %v940 = vshrl.u32 2102212464, %v931
        %v941 = vor.u32 %v939, %v940
        %v942 = vshll.u32 2102212464, %v930
        %v943 = vshrl.u32 920167782, %v931
        %v944 = vor.u32 %v942, %v943
        %v945 = vshll.u32 920167782, %v930
        %v946 = vshrl.u32 1326507024, %v931
        %v947 = vor.u32 %v945, %v946
        %vm948 = vcmp.lt.s32.totalorder %v929, 1
        %vm949 = vcmp.lt.s32.totalorder %v929, 2
        %vm950 = vcmp.lt.s32.totalorder %v929, 3
        %vm951 = vcmp.lt.s32.totalorder %v929, 4
        %v952 = vsel %vm948, %v932, %v935
        %v953 = vsel %vm951, %v941, 2102212464
        %v954 = vsel %vm950, %v938, %v953
        %v955 = vsel %vm949, %v952, %v954
        %v956 = vsel %vm948, %v935, %v938
        %v957 = vsel %vm951, %v944, 920167782
        %v958 = vsel %vm950, %v941, %v957
        %v959 = vsel %vm949, %v956, %v958
        %v960 = vsel %vm948, %v938, %v941
        %v961 = vsel %vm951, %v947, 1326507024
        %v962 = vsel %vm950, %v944, %v961
        %v963 = vsel %vm949, %v960, %v962
        %v964 = vshll.u32 %v924, 8
        %v965 = vmul.u32.u64.compose %v964, %v963
        %v966 = vextract.low.u32 %v965
        %v967 = vextract.high.u32 %v965
        %v968 = vmul.u32.u64.compose %v964, %v959
        %v969 = vextract.low.u32 %v968
        %v970 = vextract.high.u32 %v968
        %v971 = vmul.u32 %v964, %v955
        %v972 = vadd.s32 %v967, %v969
        %vm973 = vc.u32 %v967, %v969
        %v974 = vadd.s32 %v970, 1
        %v975 = vsel %vm973, %v974, %v970
        %v976 = vadd.s32 %v971, %v975
        %v977 = vadd.s32 %v976, 536870912
        %v978 = vshrl.u32 %v977, 30
        %v979 = vshll.u32 %v978, 30
        %v980 = vsub.s32 %v976, %v979
        %vm981 = vcmp.lt.s32.totalorder %v980, 0
        %v982 = vsub.s32 0, %v980
        %v983 = vsel %vm981, %v982, %v980
        %v984 = vclz %v983
        %v985 = vsub.s32 %v984, 2
        %vm986 = vcmp.gt.s32.totalorder 0, %v985
        %v987 = vsel %vm986, 0, %v985
        %v988 = vsub.s32 32, %v987
        %v989 = vshll.u32 %v980, %v987
        %v990 = vshrl.u32 %v972, %v988
        %v991 = vor.u32 %v989, %v990
        %v992 = vsub.s32 4294967266, %v987
        %v993 = vadd.s32 %v992, 127
        %v994 = vshll.u32 %v993, 23
        %v995 = vor.u32 4788187, %v994
        %v996 = vand.u32 2147483647, %v995
        %v998 = vcvt.s32.f32 %v991
        %v999 = vmul.f32 %v998, %v996
        %v1000 = vxor.u32 %v999, 2147483648
        %v1001 = vsel %vm918, %v1000, %v999
        %v1002 = vsub.s32 4, %v978
        %v1003 = vsel %vm918, %v1002, %v978
        %v1004 = vsel %vm917, %v385, %v1001
        %v1005 = vsel %vm917, 0, %v1003
        %v1006 = vcosq.f32.pop %v1004
        %v1007 = vsinq.f32.pop %v1004
        %vm1008 = vweird.f32 %v385
        %v1009 = vadd.s32 %v1005, 3
        %v1010 = vand.u32 %v1009, 3
        %vm1011 = vcmp.lt.s32.totalorder %v1010, 2
        %vm1012 = vcmp.eq.s32.totalorder %v1010, 0
        %v1013 = vxor.u32 %v1007, 2147483648
        %v1014 = vsel %vm1012, %v1006, %v1013
        %vm1015 = vcmp.eq.s32.totalorder %v1010, 2
        %v1016 = vxor.u32 %v1006, 2147483648
        %v1017 = vsel %vm1015, %v1016, %v1007
        %v1018 = vsel %vm1011, %v1014, %v1017
        %v1019 = vsel %vm1008, nan, %v1018
        %v1020 = vand.u32 2147483647, %v386
        %vm1021 = vcmp.le.f32.partialorder %v1020, 0.7853982
        %vm1022 = vcmp.lt.s32.totalorder %v386, 0
        %v1023 = vand.u32 %v386, 2139095040
        %v1024 = vshrl.u32 %v1023, 23
        %v1025 = vsub.s32 %v1024, 127
        %v1026 = vand.u32 2147483647, %v386
        %v1027 = vand.u32 %v1026, 8388607
        %v1028 = vor.u32 %v1027, 8388608
        %v1029 = vsub.s32 0, %v1028
        %v1030 = vadd.s32 %v1025, 1
        %vm1031 = vcmp.gt.s32.totalorder %v1030, 0
        %v1032 = vsel %vm1031, %v1030, 0
        %v1033 = vshrl.u32 %v1032, 5
        %v1034 = vand.u32 %v1032, 31
        %v1035 = vsub.s32 32, %v1034
        %v1036 = vshrl.u32 683565275, %v1035
        %v1037 = vshll.u32 683565275, %v1034
        %v1038 = vshrl.u32 2475754826, %v1035
        %v1039 = vor.u32 %v1037, %v1038
        %v1040 = vshll.u32 2475754826, %v1034
        %v1041 = vshrl.u32 2131351028, %v1035
        %v1042 = vor.u32 %v1040, %v1041
        %v1043 = vshll.u32 2131351028, %v1034
        %v1044 = vshrl.u32 2102212464, %v1035
        %v1045 = vor.u32 %v1043, %v1044
        %v1046 = vshll.u32 2102212464, %v1034
        %v1047 = vshrl.u32 920167782, %v1035
        %v1048 = vor.u32 %v1046, %v1047
        %v1049 = vshll.u32 920167782, %v1034
        %v1050 = vshrl.u32 1326507024, %v1035
        %v1051 = vor.u32 %v1049, %v1050
        %vm1052 = vcmp.lt.s32.totalorder %v1033, 1
        %vm1053 = vcmp.lt.s32.totalorder %v1033, 2
        %vm1054 = vcmp.lt.s32.totalorder %v1033, 3
        %vm1055 = vcmp.lt.s32.totalorder %v1033, 4
        %v1056 = vsel %vm1052, %v1036, %v1039
        %v1057 = vsel %vm1055, %v1045, 2102212464
        %v1058 = vsel %vm1054, %v1042, %v1057
        %v1059 = vsel %vm1053, %v1056, %v1058
        %v1060 = vsel %vm1052, %v1039, %v1042
        %v1061 = vsel %vm1055, %v1048, 920167782
        %v1062 = vsel %vm1054, %v1045, %v1061
        %v1063 = vsel %vm1053, %v1060, %v1062
        %v1064 = vsel %vm1052, %v1042, %v1045
        %v1065 = vsel %vm1055, %v1051, 1326507024
        %v1066 = vsel %vm1054, %v1048, %v1065
        %v1067 = vsel %vm1053, %v1064, %v1066
        %v1068 = vshll.u32 %v1028, 8
        %v1069 = vmul.u32.u64.compose %v1068, %v1067
        %v1070 = vextract.low.u32 %v1069
        %v1071 = vextract.high.u32 %v1069
        %v1072 = vmul.u32.u64.compose %v1068, %v1063
        %v1073 = vextract.low.u32 %v1072
        %v1074 = vextract.high.u32 %v1072
        %v1075 = vmul.u32 %v1068, %v1059
        %v1076 = vadd.s32 %v1071, %v1073
        %vm1077 = vc.u32 %v1071, %v1073
        %v1078 = vadd.s32 %v1074, 1
        %v1079 = vsel %vm1077, %v1078, %v1074
        %v1080 = vadd.s32 %v1075, %v1079
        %v1081 = vadd.s32 %v1080, 536870912
        %v1082 = vshrl.u32 %v1081, 30
        %v1083 = vshll.u32 %v1082, 30
        %v1084 = vsub.s32 %v1080, %v1083
        %vm1085 = vcmp.lt.s32.totalorder %v1084, 0
        %v1086 = vsub.s32 0, %v1084
        %v1087 = vsel %vm1085, %v1086, %v1084
        %v1088 = vclz %v1087
        %v1089 = vsub.s32 %v1088, 2
        %vm1090 = vcmp.gt.s32.totalorder 0, %v1089
        %v1091 = vsel %vm1090, 0, %v1089
        %v1092 = vsub.s32 32, %v1091
        %v1093 = vshll.u32 %v1084, %v1091
        %v1094 = vshrl.u32 %v1076, %v1092
        %v1095 = vor.u32 %v1093, %v1094
        %v1096 = vsub.s32 4294967266, %v1091
        %v1097 = vadd.s32 %v1096, 127
        %v1098 = vshll.u32 %v1097, 23
        %v1099 = vor.u32 4788187, %v1098
        %v1100 = vand.u32 2147483647, %v1099
        %v1102 = vcvt.s32.f32 %v1095
        %v1103 = vmul.f32 %v1102, %v1100
        %v1104 = vxor.u32 %v1103, 2147483648
        %v1105 = vsel %vm1022, %v1104, %v1103
        %v1106 = vsub.s32 4, %v1082
        %v1107 = vsel %vm1022, %v1106, %v1082
        %v1108 = vsel %vm1021, %v386, %v1105
        %v1109 = vsel %vm1021, 0, %v1107
        %v1110 = vcosq.f32.pop %v1108
        %v1111 = vsinq.f32.pop %v1108
        %vm1112 = vweird.f32 %v386
        %v1113 = vadd.s32 %v1109, 3
        %v1114 = vand.u32 %v1113, 3
        %vm1115 = vcmp.lt.s32.totalorder %v1114, 2
        %vm1116 = vcmp.eq.s32.totalorder %v1114, 0
        %v1117 = vxor.u32 %v1111, 2147483648
        %v1118 = vsel %vm1116, %v1110, %v1117
        %vm1119 = vcmp.eq.s32.totalorder %v1114, 2
        %v1120 = vxor.u32 %v1110, 2147483648
        %v1121 = vsel %vm1119, %v1120, %v1111
        %v1122 = vsel %vm1115, %v1118, %v1121
        %v1123 = vsel %vm1112, nan, %v1122
        %v1124 = vand.u32 2147483647, %v387
        %vm1125 = vcmp.le.f32.partialorder %v1124, 0.7853982
        %vm1126 = vcmp.lt.s32.totalorder %v387, 0
        %v1127 = vand.u32 %v387, 2139095040
        %v1128 = vshrl.u32 %v1127, 23
        %v1129 = vsub.s32 %v1128, 127
        %v1130 = vand.u32 2147483647, %v387
        %v1131 = vand.u32 %v1130, 8388607
        %v1132 = vor.u32 %v1131, 8388608
        %v1133 = vsub.s32 0, %v1132
        %v1134 = vadd.s32 %v1129, 1
        %vm1135 = vcmp.gt.s32.totalorder %v1134, 0
        %v1136 = vsel %vm1135, %v1134, 0
        %v1137 = vshrl.u32 %v1136, 5
        %v1138 = vand.u32 %v1136, 31
        %v1139 = vsub.s32 32, %v1138
        %v1140 = vshrl.u32 683565275, %v1139
        %v1141 = vshll.u32 683565275, %v1138
        %v1142 = vshrl.u32 2475754826, %v1139
        %v1143 = vor.u32 %v1141, %v1142
        %v1144 = vshll.u32 2475754826, %v1138
        %v1145 = vshrl.u32 2131351028, %v1139
        %v1146 = vor.u32 %v1144, %v1145
        %v1147 = vshll.u32 2131351028, %v1138
        %v1148 = vshrl.u32 2102212464, %v1139
        %v1149 = vor.u32 %v1147, %v1148
        %v1150 = vshll.u32 2102212464, %v1138
        %v1151 = vshrl.u32 920167782, %v1139
        %v1152 = vor.u32 %v1150, %v1151
        %v1153 = vshll.u32 920167782, %v1138
        %v1154 = vshrl.u32 1326507024, %v1139
        %v1155 = vor.u32 %v1153, %v1154
        %vm1156 = vcmp.lt.s32.totalorder %v1137, 1
        %vm1157 = vcmp.lt.s32.totalorder %v1137, 2
        %vm1158 = vcmp.lt.s32.totalorder %v1137, 3
        %vm1159 = vcmp.lt.s32.totalorder %v1137, 4
        %v1160 = vsel %vm1156, %v1140, %v1143
        %v1161 = vsel %vm1159, %v1149, 2102212464
        %v1162 = vsel %vm1158, %v1146, %v1161
        %v1163 = vsel %vm1157, %v1160, %v1162
        %v1164 = vsel %vm1156, %v1143, %v1146
        %v1165 = vsel %vm1159, %v1152, 920167782
        %v1166 = vsel %vm1158, %v1149, %v1165
        %v1167 = vsel %vm1157, %v1164, %v1166
        %v1168 = vsel %vm1156, %v1146, %v1149
        %v1169 = vsel %vm1159, %v1155, 1326507024
        %v1170 = vsel %vm1158, %v1152, %v1169
        %v1171 = vsel %vm1157, %v1168, %v1170
        %v1172 = vshll.u32 %v1132, 8
        %v1173 = vmul.u32.u64.compose %v1172, %v1171
        %v1174 = vextract.low.u32 %v1173
        %v1175 = vextract.high.u32 %v1173
        %v1176 = vmul.u32.u64.compose %v1172, %v1167
        %v1177 = vextract.low.u32 %v1176
        %v1178 = vextract.high.u32 %v1176
        %v1179 = vmul.u32 %v1172, %v1163
        %v1180 = vadd.s32 %v1175, %v1177
        %vm1181 = vc.u32 %v1175, %v1177
        %v1182 = vadd.s32 %v1178, 1
        %v1183 = vsel %vm1181, %v1182, %v1178
        %v1184 = vadd.s32 %v1179, %v1183
        %v1185 = vadd.s32 %v1184, 536870912
        %v1186 = vshrl.u32 %v1185, 30
        %v1187 = vshll.u32 %v1186, 30
        %v1188 = vsub.s32 %v1184, %v1187
        %vm1189 = vcmp.lt.s32.totalorder %v1188, 0
        %v1190 = vsub.s32 0, %v1188
        %v1191 = vsel %vm1189, %v1190, %v1188
        %v1192 = vclz %v1191
        %v1193 = vsub.s32 %v1192, 2
        %vm1194 = vcmp.gt.s32.totalorder 0, %v1193
        %v1195 = vsel %vm1194, 0, %v1193
        %v1196 = vsub.s32 32, %v1195
        %v1197 = vshll.u32 %v1188, %v1195
        %v1198 = vshrl.u32 %v1180, %v1196
        %v1199 = vor.u32 %v1197, %v1198
        %v1200 = vsub.s32 4294967266, %v1195
        %v1201 = vadd.s32 %v1200, 127
        %v1202 = vshll.u32 %v1201, 23
        %v1203 = vor.u32 4788187, %v1202
        %v1204 = vand.u32 2147483647, %v1203
        %v1206 = vcvt.s32.f32 %v1199
        %v1207 = vmul.f32 %v1206, %v1204
        %v1208 = vxor.u32 %v1207, 2147483648
        %v1209 = vsel %vm1126, %v1208, %v1207
        %v1210 = vsub.s32 4, %v1186
        %v1211 = vsel %vm1126, %v1210, %v1186
        %v1212 = vsel %vm1125, %v387, %v1209
        %v1213 = vsel %vm1125, 0, %v1211
        %v1214 = vcosq.f32.pop %v1212
        %v1215 = vsinq.f32.pop %v1212
        %vm1216 = vweird.f32 %v387
        %v1217 = vadd.s32 %v1213, 3
        %v1218 = vand.u32 %v1217, 3
        %vm1219 = vcmp.lt.s32.totalorder %v1218, 2
        %vm1220 = vcmp.eq.s32.totalorder %v1218, 0
        %v1221 = vxor.u32 %v1215, 2147483648
        %v1222 = vsel %vm1220, %v1214, %v1221
        %vm1223 = vcmp.eq.s32.totalorder %v1218, 2
        %v1224 = vxor.u32 %v1214, 2147483648
        %v1225 = vsel %vm1223, %v1224, %v1215
        %v1226 = vsel %vm1219, %v1222, %v1225
        %v1227 = vsel %vm1216, nan, %v1226
        %v1228 = vand.u32 2147483647, %v388
        %vm1229 = vcmp.le.f32.partialorder %v1228, 0.7853982
        %vm1230 = vcmp.lt.s32.totalorder %v388, 0
        %v1231 = vand.u32 %v388, 2139095040
        %v1232 = vshrl.u32 %v1231, 23
        %v1233 = vsub.s32 %v1232, 127
        %v1234 = vand.u32 2147483647, %v388
        %v1235 = vand.u32 %v1234, 8388607
        %v1236 = vor.u32 %v1235, 8388608
        %v1237 = vsub.s32 0, %v1236
        %v1238 = vadd.s32 %v1233, 1
        %vm1239 = vcmp.gt.s32.totalorder %v1238, 0
        %v1240 = vsel %vm1239, %v1238, 0
        %v1241 = vshrl.u32 %v1240, 5
        %v1242 = vand.u32 %v1240, 31
        %v1243 = vsub.s32 32, %v1242
        %v1244 = vshrl.u32 683565275, %v1243
        %v1245 = vshll.u32 683565275, %v1242
        %v1246 = vshrl.u32 2475754826, %v1243
        %v1247 = vor.u32 %v1245, %v1246
        %v1248 = vshll.u32 2475754826, %v1242
        %v1249 = vshrl.u32 2131351028, %v1243
        %v1250 = vor.u32 %v1248, %v1249
        %v1251 = vshll.u32 2131351028, %v1242
        %v1252 = vshrl.u32 2102212464, %v1243
        %v1253 = vor.u32 %v1251, %v1252
        %v1254 = vshll.u32 2102212464, %v1242
        %v1255 = vshrl.u32 920167782, %v1243
        %v1256 = vor.u32 %v1254, %v1255
        %v1257 = vshll.u32 920167782, %v1242
        %v1258 = vshrl.u32 1326507024, %v1243
        %v1259 = vor.u32 %v1257, %v1258
        %vm1260 = vcmp.lt.s32.totalorder %v1241, 1
        %vm1261 = vcmp.lt.s32.totalorder %v1241, 2
        %vm1262 = vcmp.lt.s32.totalorder %v1241, 3
        %vm1263 = vcmp.lt.s32.totalorder %v1241, 4
        %v1264 = vsel %vm1260, %v1244, %v1247
        %v1265 = vsel %vm1263, %v1253, 2102212464
        %v1266 = vsel %vm1262, %v1250, %v1265
        %v1267 = vsel %vm1261, %v1264, %v1266
        %v1268 = vsel %vm1260, %v1247, %v1250
        %v1269 = vsel %vm1263, %v1256, 920167782
        %v1270 = vsel %vm1262, %v1253, %v1269
        %v1271 = vsel %vm1261, %v1268, %v1270
        %v1272 = vsel %vm1260, %v1250, %v1253
        %v1273 = vsel %vm1263, %v1259, 1326507024
        %v1274 = vsel %vm1262, %v1256, %v1273
        %v1275 = vsel %vm1261, %v1272, %v1274
        %v1276 = vshll.u32 %v1236, 8
        %v1277 = vmul.u32.u64.compose %v1276, %v1275
        %v1278 = vextract.low.u32 %v1277
        %v1279 = vextract.high.u32 %v1277
        %v1280 = vmul.u32.u64.compose %v1276, %v1271
        %v1281 = vextract.low.u32 %v1280
        %v1282 = vextract.high.u32 %v1280
        %v1283 = vmul.u32 %v1276, %v1267
        %v1284 = vadd.s32 %v1279, %v1281
        %vm1285 = vc.u32 %v1279, %v1281
        %v1286 = vadd.s32 %v1282, 1
        %v1287 = vsel %vm1285, %v1286, %v1282
        %v1288 = vadd.s32 %v1283, %v1287
        %v1289 = vadd.s32 %v1288, 536870912
        %v1290 = vshrl.u32 %v1289, 30
        %v1291 = vshll.u32 %v1290, 30
        %v1292 = vsub.s32 %v1288, %v1291
        %vm1293 = vcmp.lt.s32.totalorder %v1292, 0
        %v1294 = vsub.s32 0, %v1292
        %v1295 = vsel %vm1293, %v1294, %v1292
        %v1296 = vclz %v1295
        %v1297 = vsub.s32 %v1296, 2
        %vm1298 = vcmp.gt.s32.totalorder 0, %v1297
        %v1299 = vsel %vm1298, 0, %v1297
        %v1300 = vsub.s32 32, %v1299
        %v1301 = vshll.u32 %v1292, %v1299
        %v1302 = vshrl.u32 %v1284, %v1300
        %v1303 = vor.u32 %v1301, %v1302
        %v1304 = vsub.s32 4294967266, %v1299
        %v1305 = vadd.s32 %v1304, 127
        %v1306 = vshll.u32 %v1305, 23
        %v1307 = vor.u32 4788187, %v1306
        %v1308 = vand.u32 2147483647, %v1307
        %v1310 = vcvt.s32.f32 %v1303
        %v1311 = vmul.f32 %v1310, %v1308
        %v1312 = vxor.u32 %v1311, 2147483648
        %v1313 = vsel %vm1230, %v1312, %v1311
        %v1314 = vsub.s32 4, %v1290
        %v1315 = vsel %vm1230, %v1314, %v1290
        %v1316 = vsel %vm1229, %v388, %v1313
        %v1317 = vsel %vm1229, 0, %v1315
        %v1318 = vcosq.f32.pop %v1316
        %v1319 = vsinq.f32.pop %v1316
        %vm1320 = vweird.f32 %v388
        %v1321 = vadd.s32 %v1317, 3
        %v1322 = vand.u32 %v1321, 3
        %vm1323 = vcmp.lt.s32.totalorder %v1322, 2
        %vm1324 = vcmp.eq.s32.totalorder %v1322, 0
        %v1325 = vxor.u32 %v1319, 2147483648
        %v1326 = vsel %vm1324, %v1318, %v1325
        %vm1327 = vcmp.eq.s32.totalorder %v1322, 2
        %v1328 = vxor.u32 %v1318, 2147483648
        %v1329 = vsel %vm1327, %v1328, %v1319
        %v1330 = vsel %vm1323, %v1326, %v1329
        %v1331 = vsel %vm1320, nan, %v1330
        %v1332 = vand.u32 2147483647, %v389
        %vm1333 = vcmp.le.f32.partialorder %v1332, 0.7853982
        %vm1334 = vcmp.lt.s32.totalorder %v389, 0
        %v1335 = vand.u32 %v389, 2139095040
        %v1336 = vshrl.u32 %v1335, 23
        %v1337 = vsub.s32 %v1336, 127
        %v1338 = vand.u32 2147483647, %v389
        %v1339 = vand.u32 %v1338, 8388607
        %v1340 = vor.u32 %v1339, 8388608
        %v1341 = vsub.s32 0, %v1340
        %v1342 = vadd.s32 %v1337, 1
        %vm1343 = vcmp.gt.s32.totalorder %v1342, 0
        %v1344 = vsel %vm1343, %v1342, 0
        %v1345 = vshrl.u32 %v1344, 5
        %v1346 = vand.u32 %v1344, 31
        %v1347 = vsub.s32 32, %v1346
        %v1348 = vshrl.u32 683565275, %v1347
        %v1349 = vshll.u32 683565275, %v1346
        %v1350 = vshrl.u32 2475754826, %v1347
        %v1351 = vor.u32 %v1349, %v1350
        %v1352 = vshll.u32 2475754826, %v1346
        %v1353 = vshrl.u32 2131351028, %v1347
        %v1354 = vor.u32 %v1352, %v1353
        %v1355 = vshll.u32 2131351028, %v1346
        %v1356 = vshrl.u32 2102212464, %v1347
        %v1357 = vor.u32 %v1355, %v1356
        %v1358 = vshll.u32 2102212464, %v1346
        %v1359 = vshrl.u32 920167782, %v1347
        %v1360 = vor.u32 %v1358, %v1359
        %v1361 = vshll.u32 920167782, %v1346
        %v1362 = vshrl.u32 1326507024, %v1347
        %v1363 = vor.u32 %v1361, %v1362
        %vm1364 = vcmp.lt.s32.totalorder %v1345, 1
        %vm1365 = vcmp.lt.s32.totalorder %v1345, 2
        %vm1366 = vcmp.lt.s32.totalorder %v1345, 3
        %vm1367 = vcmp.lt.s32.totalorder %v1345, 4
        %v1368 = vsel %vm1364, %v1348, %v1351
        %v1369 = vsel %vm1367, %v1357, 2102212464
        %v1370 = vsel %vm1366, %v1354, %v1369
        %v1371 = vsel %vm1365, %v1368, %v1370
        %v1372 = vsel %vm1364, %v1351, %v1354
        %v1373 = vsel %vm1367, %v1360, 920167782
        %v1374 = vsel %vm1366, %v1357, %v1373
        %v1375 = vsel %vm1365, %v1372, %v1374
        %v1376 = vsel %vm1364, %v1354, %v1357
        %v1377 = vsel %vm1367, %v1363, 1326507024
        %v1378 = vsel %vm1366, %v1360, %v1377
        %v1379 = vsel %vm1365, %v1376, %v1378
        %v1380 = vshll.u32 %v1340, 8
        %v1381 = vmul.u32.u64.compose %v1380, %v1379
        %v1382 = vextract.low.u32 %v1381
        %v1383 = vextract.high.u32 %v1381
        %v1384 = vmul.u32.u64.compose %v1380, %v1375
        %v1385 = vextract.low.u32 %v1384
        %v1386 = vextract.high.u32 %v1384
        %v1387 = vmul.u32 %v1380, %v1371
        %v1388 = vadd.s32 %v1383, %v1385
        %vm1389 = vc.u32 %v1383, %v1385
        %v1390 = vadd.s32 %v1386, 1
        %v1391 = vsel %vm1389, %v1390, %v1386
        %v1392 = vadd.s32 %v1387, %v1391
        %v1393 = vadd.s32 %v1392, 536870912
        %v1394 = vshrl.u32 %v1393, 30
        %v1395 = vshll.u32 %v1394, 30
        %v1396 = vsub.s32 %v1392, %v1395
        %vm1397 = vcmp.lt.s32.totalorder %v1396, 0
        %v1398 = vsub.s32 0, %v1396
        %v1399 = vsel %vm1397, %v1398, %v1396
        %v1400 = vclz %v1399
        %v1401 = vsub.s32 %v1400, 2
        %vm1402 = vcmp.gt.s32.totalorder 0, %v1401
        %v1403 = vsel %vm1402, 0, %v1401
        %v1404 = vsub.s32 32, %v1403
        %v1405 = vshll.u32 %v1396, %v1403
        %v1406 = vshrl.u32 %v1388, %v1404
        %v1407 = vor.u32 %v1405, %v1406
        %v1408 = vsub.s32 4294967266, %v1403
        %v1409 = vadd.s32 %v1408, 127
        %v1410 = vshll.u32 %v1409, 23
        %v1411 = vor.u32 4788187, %v1410
        %v1412 = vand.u32 2147483647, %v1411
        %v1414 = vcvt.s32.f32 %v1407
        %v1415 = vmul.f32 %v1414, %v1412
        %v1416 = vxor.u32 %v1415, 2147483648
        %v1417 = vsel %vm1334, %v1416, %v1415
        %v1418 = vsub.s32 4, %v1394
        %v1419 = vsel %vm1334, %v1418, %v1394
        %v1420 = vsel %vm1333, %v389, %v1417
        %v1421 = vsel %vm1333, 0, %v1419
        %v1422 = vcosq.f32.pop %v1420
        %v1423 = vsinq.f32.pop %v1420
        %vm1424 = vweird.f32 %v389
        %v1425 = vadd.s32 %v1421, 3
        %v1426 = vand.u32 %v1425, 3
        %vm1427 = vcmp.lt.s32.totalorder %v1426, 2
        %vm1428 = vcmp.eq.s32.totalorder %v1426, 0
        %v1429 = vxor.u32 %v1423, 2147483648
        %v1430 = vsel %vm1428, %v1422, %v1429
        %vm1431 = vcmp.eq.s32.totalorder %v1426, 2
        %v1432 = vxor.u32 %v1422, 2147483648
        %v1433 = vsel %vm1431, %v1432, %v1423
        %v1434 = vsel %vm1427, %v1430, %v1433
        %v1435 = vsel %vm1424, nan, %v1434
        %v1436 = vand.u32 2147483647, %v390
        %vm1437 = vcmp.le.f32.partialorder %v1436, 0.7853982
        %vm1438 = vcmp.lt.s32.totalorder %v390, 0
        %v1439 = vand.u32 %v390, 2139095040
        %v1440 = vshrl.u32 %v1439, 23
        %v1441 = vsub.s32 %v1440, 127
        %v1442 = vand.u32 2147483647, %v390
        %v1443 = vand.u32 %v1442, 8388607
        %v1444 = vor.u32 %v1443, 8388608
        %v1445 = vsub.s32 0, %v1444
        %v1446 = vadd.s32 %v1441, 1
        %vm1447 = vcmp.gt.s32.totalorder %v1446, 0
        %v1448 = vsel %vm1447, %v1446, 0
        %v1449 = vshrl.u32 %v1448, 5
        %v1450 = vand.u32 %v1448, 31
        %v1451 = vsub.s32 32, %v1450
        %v1452 = vshrl.u32 683565275, %v1451
        %v1453 = vshll.u32 683565275, %v1450
        %v1454 = vshrl.u32 2475754826, %v1451
        %v1455 = vor.u32 %v1453, %v1454
        %v1456 = vshll.u32 2475754826, %v1450
        %v1457 = vshrl.u32 2131351028, %v1451
        %v1458 = vor.u32 %v1456, %v1457
        %v1459 = vshll.u32 2131351028, %v1450
        %v1460 = vshrl.u32 2102212464, %v1451
        %v1461 = vor.u32 %v1459, %v1460
        %v1462 = vshll.u32 2102212464, %v1450
        %v1463 = vshrl.u32 920167782, %v1451
        %v1464 = vor.u32 %v1462, %v1463
        %v1465 = vshll.u32 920167782, %v1450
        %v1466 = vshrl.u32 1326507024, %v1451
        %v1467 = vor.u32 %v1465, %v1466
        %vm1468 = vcmp.lt.s32.totalorder %v1449, 1
        %vm1469 = vcmp.lt.s32.totalorder %v1449, 2
        %vm1470 = vcmp.lt.s32.totalorder %v1449, 3
        %vm1471 = vcmp.lt.s32.totalorder %v1449, 4
        %v1472 = vsel %vm1468, %v1452, %v1455
        %v1473 = vsel %vm1471, %v1461, 2102212464
        %v1474 = vsel %vm1470, %v1458, %v1473
        %v1475 = vsel %vm1469, %v1472, %v1474
        %v1476 = vsel %vm1468, %v1455, %v1458
        %v1477 = vsel %vm1471, %v1464, 920167782
        %v1478 = vsel %vm1470, %v1461, %v1477
        %v1479 = vsel %vm1469, %v1476, %v1478
        %v1480 = vsel %vm1468, %v1458, %v1461
        %v1481 = vsel %vm1471, %v1467, 1326507024
        %v1482 = vsel %vm1470, %v1464, %v1481
        %v1483 = vsel %vm1469, %v1480, %v1482
        %v1484 = vshll.u32 %v1444, 8
        %v1485 = vmul.u32.u64.compose %v1484, %v1483
        %v1486 = vextract.low.u32 %v1485
        %v1487 = vextract.high.u32 %v1485
        %v1488 = vmul.u32.u64.compose %v1484, %v1479
        %v1489 = vextract.low.u32 %v1488
        %v1490 = vextract.high.u32 %v1488
        %v1491 = vmul.u32 %v1484, %v1475
        %v1492 = vadd.s32 %v1487, %v1489
        %vm1493 = vc.u32 %v1487, %v1489
        %v1494 = vadd.s32 %v1490, 1
        %v1495 = vsel %vm1493, %v1494, %v1490
        %v1496 = vadd.s32 %v1491, %v1495
        %v1497 = vadd.s32 %v1496, 536870912
        %v1498 = vshrl.u32 %v1497, 30
        %v1499 = vshll.u32 %v1498, 30
        %v1500 = vsub.s32 %v1496, %v1499
        %vm1501 = vcmp.lt.s32.totalorder %v1500, 0
        %v1502 = vsub.s32 0, %v1500
        %v1503 = vsel %vm1501, %v1502, %v1500
        %v1504 = vclz %v1503
        %v1505 = vsub.s32 %v1504, 2
        %vm1506 = vcmp.gt.s32.totalorder 0, %v1505
        %v1507 = vsel %vm1506, 0, %v1505
        %v1508 = vsub.s32 32, %v1507
        %v1509 = vshll.u32 %v1500, %v1507
        %v1510 = vshrl.u32 %v1492, %v1508
        %v1511 = vor.u32 %v1509, %v1510
        %v1512 = vsub.s32 4294967266, %v1507
        %v1513 = vadd.s32 %v1512, 127
        %v1514 = vshll.u32 %v1513, 23
        %v1515 = vor.u32 4788187, %v1514
        %v1516 = vand.u32 2147483647, %v1515
        %v1518 = vcvt.s32.f32 %v1511
        %v1519 = vmul.f32 %v1518, %v1516
        %v1520 = vxor.u32 %v1519, 2147483648
        %v1521 = vsel %vm1438, %v1520, %v1519
        %v1522 = vsub.s32 4, %v1498
        %v1523 = vsel %vm1438, %v1522, %v1498
        %v1524 = vsel %vm1437, %v390, %v1521
        %v1525 = vsel %vm1437, 0, %v1523
        %v1526 = vcosq.f32.pop %v1524
        %v1527 = vsinq.f32.pop %v1524
        %vm1528 = vweird.f32 %v390
        %v1529 = vadd.s32 %v1525, 3
        %v1530 = vand.u32 %v1529, 3
        %vm1531 = vcmp.lt.s32.totalorder %v1530, 2
        %vm1532 = vcmp.eq.s32.totalorder %v1530, 0
        %v1533 = vxor.u32 %v1527, 2147483648
        %v1534 = vsel %vm1532, %v1526, %v1533
        %vm1535 = vcmp.eq.s32.totalorder %v1530, 2
        %v1536 = vxor.u32 %v1526, 2147483648
        %v1537 = vsel %vm1535, %v1536, %v1527
        %v1538 = vsel %vm1531, %v1534, %v1537
        %v1539 = vsel %vm1528, nan, %v1538
        %v1540 = vand.u32 2147483647, %v391
        %vm1541 = vcmp.le.f32.partialorder %v1540, 0.7853982
        %vm1542 = vcmp.lt.s32.totalorder %v391, 0
        %v1543 = vand.u32 %v391, 2139095040
        %v1544 = vshrl.u32 %v1543, 23
        %v1545 = vsub.s32 %v1544, 127
        %v1546 = vand.u32 2147483647, %v391
        %v1547 = vand.u32 %v1546, 8388607
        %v1548 = vor.u32 %v1547, 8388608
        %v1549 = vsub.s32 0, %v1548
        %v1550 = vadd.s32 %v1545, 1
        %vm1551 = vcmp.gt.s32.totalorder %v1550, 0
        %v1552 = vsel %vm1551, %v1550, 0
        %v1553 = vshrl.u32 %v1552, 5
        %v1554 = vand.u32 %v1552, 31
        %v1555 = vsub.s32 32, %v1554
        %v1556 = vshrl.u32 683565275, %v1555
        %v1557 = vshll.u32 683565275, %v1554
        %v1558 = vshrl.u32 2475754826, %v1555
        %v1559 = vor.u32 %v1557, %v1558
        %v1560 = vshll.u32 2475754826, %v1554
        %v1561 = vshrl.u32 2131351028, %v1555
        %v1562 = vor.u32 %v1560, %v1561
        %v1563 = vshll.u32 2131351028, %v1554
        %v1564 = vshrl.u32 2102212464, %v1555
        %v1565 = vor.u32 %v1563, %v1564
        %v1566 = vshll.u32 2102212464, %v1554
        %v1567 = vshrl.u32 920167782, %v1555
        %v1568 = vor.u32 %v1566, %v1567
        %v1569 = vshll.u32 920167782, %v1554
        %v1570 = vshrl.u32 1326507024, %v1555
        %v1571 = vor.u32 %v1569, %v1570
        %vm1572 = vcmp.lt.s32.totalorder %v1553, 1
        %vm1573 = vcmp.lt.s32.totalorder %v1553, 2
        %vm1574 = vcmp.lt.s32.totalorder %v1553, 3
        %vm1575 = vcmp.lt.s32.totalorder %v1553, 4
        %v1576 = vsel %vm1572, %v1556, %v1559
        %v1577 = vsel %vm1575, %v1565, 2102212464
        %v1578 = vsel %vm1574, %v1562, %v1577
        %v1579 = vsel %vm1573, %v1576, %v1578
        %v1580 = vsel %vm1572, %v1559, %v1562
        %v1581 = vsel %vm1575, %v1568, 920167782
        %v1582 = vsel %vm1574, %v1565, %v1581
        %v1583 = vsel %vm1573, %v1580, %v1582
        %v1584 = vsel %vm1572, %v1562, %v1565
        %v1585 = vsel %vm1575, %v1571, 1326507024
        %v1586 = vsel %vm1574, %v1568, %v1585
        %v1587 = vsel %vm1573, %v1584, %v1586
        %v1588 = vshll.u32 %v1548, 8
        %v1589 = vmul.u32.u64.compose %v1588, %v1587
        %v1590 = vextract.low.u32 %v1589
        %v1591 = vextract.high.u32 %v1589
        %v1592 = vmul.u32.u64.compose %v1588, %v1583
        %v1593 = vextract.low.u32 %v1592
        %v1594 = vextract.high.u32 %v1592
        %v1595 = vmul.u32 %v1588, %v1579
        %v1596 = vadd.s32 %v1591, %v1593
        %vm1597 = vc.u32 %v1591, %v1593
        %v1598 = vadd.s32 %v1594, 1
        %v1599 = vsel %vm1597, %v1598, %v1594
        %v1600 = vadd.s32 %v1595, %v1599
        %v1601 = vadd.s32 %v1600, 536870912
        %v1602 = vshrl.u32 %v1601, 30
        %v1603 = vshll.u32 %v1602, 30
        %v1604 = vsub.s32 %v1600, %v1603
        %vm1605 = vcmp.lt.s32.totalorder %v1604, 0
        %v1606 = vsub.s32 0, %v1604
        %v1607 = vsel %vm1605, %v1606, %v1604
        %v1608 = vclz %v1607
        %v1609 = vsub.s32 %v1608, 2
        %vm1610 = vcmp.gt.s32.totalorder 0, %v1609
        %v1611 = vsel %vm1610, 0, %v1609
        %v1612 = vsub.s32 32, %v1611
        %v1613 = vshll.u32 %v1604, %v1611
        %v1614 = vshrl.u32 %v1596, %v1612
        %v1615 = vor.u32 %v1613, %v1614
        %v1616 = vsub.s32 4294967266, %v1611
        %v1617 = vadd.s32 %v1616, 127
        %v1618 = vshll.u32 %v1617, 23
        %v1619 = vor.u32 4788187, %v1618
        %v1620 = vand.u32 2147483647, %v1619
        %v1622 = vcvt.s32.f32 %v1615
        %v1623 = vmul.f32 %v1622, %v1620
        %v1624 = vxor.u32 %v1623, 2147483648
        %v1625 = vsel %vm1542, %v1624, %v1623
        %v1626 = vsub.s32 4, %v1602
        %v1627 = vsel %vm1542, %v1626, %v1602
        %v1628 = vsel %vm1541, %v391, %v1625
        %v1629 = vsel %vm1541, 0, %v1627
        %v1630 = vcosq.f32.pop %v1628
        %v1631 = vsinq.f32.pop %v1628
        %vm1632 = vweird.f32 %v391
        %v1633 = vadd.s32 %v1629, 3
        %v1634 = vand.u32 %v1633, 3
        %vm1635 = vcmp.lt.s32.totalorder %v1634, 2
        %vm1636 = vcmp.eq.s32.totalorder %v1634, 0
        %v1637 = vxor.u32 %v1631, 2147483648
        %v1638 = vsel %vm1636, %v1630, %v1637
        %vm1639 = vcmp.eq.s32.totalorder %v1634, 2
        %v1640 = vxor.u32 %v1630, 2147483648
        %v1641 = vsel %vm1639, %v1640, %v1631
        %v1642 = vsel %vm1635, %v1638, %v1641
        %v1643 = vsel %vm1632, nan, %v1642
        %v1644 = vand.u32 2147483647, %v392
        %vm1645 = vcmp.le.f32.partialorder %v1644, 0.7853982
        %vm1646 = vcmp.lt.s32.totalorder %v392, 0
        %v1647 = vand.u32 %v392, 2139095040
        %v1648 = vshrl.u32 %v1647, 23
        %v1649 = vsub.s32 %v1648, 127
        %v1650 = vand.u32 2147483647, %v392
        %v1651 = vand.u32 %v1650, 8388607
        %v1652 = vor.u32 %v1651, 8388608
        %v1653 = vsub.s32 0, %v1652
        %v1654 = vadd.s32 %v1649, 1
        %vm1655 = vcmp.gt.s32.totalorder %v1654, 0
        %v1656 = vsel %vm1655, %v1654, 0
        %v1657 = vshrl.u32 %v1656, 5
        %v1658 = vand.u32 %v1656, 31
        %v1659 = vsub.s32 32, %v1658
        %v1660 = vshrl.u32 683565275, %v1659
        %v1661 = vshll.u32 683565275, %v1658
        %v1662 = vshrl.u32 2475754826, %v1659
        %v1663 = vor.u32 %v1661, %v1662
        %v1664 = vshll.u32 2475754826, %v1658
        %v1665 = vshrl.u32 2131351028, %v1659
        %v1666 = vor.u32 %v1664, %v1665
        %v1667 = vshll.u32 2131351028, %v1658
        %v1668 = vshrl.u32 2102212464, %v1659
        %v1669 = vor.u32 %v1667, %v1668
        %v1670 = vshll.u32 2102212464, %v1658
        %v1671 = vshrl.u32 920167782, %v1659
        %v1672 = vor.u32 %v1670, %v1671
        %v1673 = vshll.u32 920167782, %v1658
        %v1674 = vshrl.u32 1326507024, %v1659
        %v1675 = vor.u32 %v1673, %v1674
        %vm1676 = vcmp.lt.s32.totalorder %v1657, 1
        %vm1677 = vcmp.lt.s32.totalorder %v1657, 2
        %vm1678 = vcmp.lt.s32.totalorder %v1657, 3
        %vm1679 = vcmp.lt.s32.totalorder %v1657, 4
        %v1680 = vsel %vm1676, %v1660, %v1663
        %v1681 = vsel %vm1679, %v1669, 2102212464
        %v1682 = vsel %vm1678, %v1666, %v1681
        %v1683 = vsel %vm1677, %v1680, %v1682
        %v1684 = vsel %vm1676, %v1663, %v1666
        %v1685 = vsel %vm1679, %v1672, 920167782
        %v1686 = vsel %vm1678, %v1669, %v1685
        %v1687 = vsel %vm1677, %v1684, %v1686
        %v1688 = vsel %vm1676, %v1666, %v1669
        %v1689 = vsel %vm1679, %v1675, 1326507024
        %v1690 = vsel %vm1678, %v1672, %v1689
        %v1691 = vsel %vm1677, %v1688, %v1690
        %v1692 = vshll.u32 %v1652, 8
        %v1693 = vmul.u32.u64.compose %v1692, %v1691
        %v1694 = vextract.low.u32 %v1693
        %v1695 = vextract.high.u32 %v1693
        %v1696 = vmul.u32.u64.compose %v1692, %v1687
        %v1697 = vextract.low.u32 %v1696
        %v1698 = vextract.high.u32 %v1696
        %v1699 = vmul.u32 %v1692, %v1683
        %v1700 = vadd.s32 %v1695, %v1697
        %vm1701 = vc.u32 %v1695, %v1697
        %v1702 = vadd.s32 %v1698, 1
        %v1703 = vsel %vm1701, %v1702, %v1698
        %v1704 = vadd.s32 %v1699, %v1703
        %v1705 = vadd.s32 %v1704, 536870912
        %v1706 = vshrl.u32 %v1705, 30
        %v1707 = vshll.u32 %v1706, 30
        %v1708 = vsub.s32 %v1704, %v1707
        %vm1709 = vcmp.lt.s32.totalorder %v1708, 0
        %v1710 = vsub.s32 0, %v1708
        %v1711 = vsel %vm1709, %v1710, %v1708
        %v1712 = vclz %v1711
        %v1713 = vsub.s32 %v1712, 2
        %vm1714 = vcmp.gt.s32.totalorder 0, %v1713
        %v1715 = vsel %vm1714, 0, %v1713
        %v1716 = vsub.s32 32, %v1715
        %v1717 = vshll.u32 %v1708, %v1715
        %v1718 = vshrl.u32 %v1700, %v1716
        %v1719 = vor.u32 %v1717, %v1718
        %v1720 = vsub.s32 4294967266, %v1715
        %v1721 = vadd.s32 %v1720, 127
        %v1722 = vshll.u32 %v1721, 23
        %v1723 = vor.u32 4788187, %v1722
        %v1724 = vand.u32 2147483647, %v1723
        %v1726 = vcvt.s32.f32 %v1719
        %v1727 = vmul.f32 %v1726, %v1724
        %v1728 = vxor.u32 %v1727, 2147483648
        %v1729 = vsel %vm1646, %v1728, %v1727
        %v1730 = vsub.s32 4, %v1706
        %v1731 = vsel %vm1646, %v1730, %v1706
        %v1732 = vsel %vm1645, %v392, %v1729
        %v1733 = vsel %vm1645, 0, %v1731
        %v1734 = vcosq.f32.pop %v1732
        %v1735 = vsinq.f32.pop %v1732
        %vm1736 = vweird.f32 %v392
        %v1737 = vadd.s32 %v1733, 3
        %v1738 = vand.u32 %v1737, 3
        %vm1739 = vcmp.lt.s32.totalorder %v1738, 2
        %vm1740 = vcmp.eq.s32.totalorder %v1738, 0
        %v1741 = vxor.u32 %v1735, 2147483648
        %v1742 = vsel %vm1740, %v1734, %v1741
        %vm1743 = vcmp.eq.s32.totalorder %v1738, 2
        %v1744 = vxor.u32 %v1734, 2147483648
        %v1745 = vsel %vm1743, %v1744, %v1735
        %v1746 = vsel %vm1739, %v1742, %v1745
        %v1747 = vsel %vm1736, nan, %v1746
        %v1748 = vand.u32 2147483647, %v393
        %vm1749 = vcmp.le.f32.partialorder %v1748, 0.7853982
        %vm1750 = vcmp.lt.s32.totalorder %v393, 0
        %v1751 = vand.u32 %v393, 2139095040
        %v1752 = vshrl.u32 %v1751, 23
        %v1753 = vsub.s32 %v1752, 127
        %v1754 = vand.u32 2147483647, %v393
        %v1755 = vand.u32 %v1754, 8388607
        %v1756 = vor.u32 %v1755, 8388608
        %v1757 = vsub.s32 0, %v1756
        %v1758 = vadd.s32 %v1753, 1
        %vm1759 = vcmp.gt.s32.totalorder %v1758, 0
        %v1760 = vsel %vm1759, %v1758, 0
        %v1761 = vshrl.u32 %v1760, 5
        %v1762 = vand.u32 %v1760, 31
        %v1763 = vsub.s32 32, %v1762
        %v1764 = vshrl.u32 683565275, %v1763
        %v1765 = vshll.u32 683565275, %v1762
        %v1766 = vshrl.u32 2475754826, %v1763
        %v1767 = vor.u32 %v1765, %v1766
        %v1768 = vshll.u32 2475754826, %v1762
        %v1769 = vshrl.u32 2131351028, %v1763
        %v1770 = vor.u32 %v1768, %v1769
        %v1771 = vshll.u32 2131351028, %v1762
        %v1772 = vshrl.u32 2102212464, %v1763
        %v1773 = vor.u32 %v1771, %v1772
        %v1774 = vshll.u32 2102212464, %v1762
        %v1775 = vshrl.u32 920167782, %v1763
        %v1776 = vor.u32 %v1774, %v1775
        %v1777 = vshll.u32 920167782, %v1762
        %v1778 = vshrl.u32 1326507024, %v1763
        %v1779 = vor.u32 %v1777, %v1778
        %vm1780 = vcmp.lt.s32.totalorder %v1761, 1
        %vm1781 = vcmp.lt.s32.totalorder %v1761, 2
        %vm1782 = vcmp.lt.s32.totalorder %v1761, 3
        %vm1783 = vcmp.lt.s32.totalorder %v1761, 4
        %v1784 = vsel %vm1780, %v1764, %v1767
        %v1785 = vsel %vm1783, %v1773, 2102212464
        %v1786 = vsel %vm1782, %v1770, %v1785
        %v1787 = vsel %vm1781, %v1784, %v1786
        %v1788 = vsel %vm1780, %v1767, %v1770
        %v1789 = vsel %vm1783, %v1776, 920167782
        %v1790 = vsel %vm1782, %v1773, %v1789
        %v1791 = vsel %vm1781, %v1788, %v1790
        %v1792 = vsel %vm1780, %v1770, %v1773
        %v1793 = vsel %vm1783, %v1779, 1326507024
        %v1794 = vsel %vm1782, %v1776, %v1793
        %v1795 = vsel %vm1781, %v1792, %v1794
        %v1796 = vshll.u32 %v1756, 8
        %v1797 = vmul.u32.u64.compose %v1796, %v1795
        %v1798 = vextract.low.u32 %v1797
        %v1799 = vextract.high.u32 %v1797
        %v1800 = vmul.u32.u64.compose %v1796, %v1791
        %v1801 = vextract.low.u32 %v1800
        %v1802 = vextract.high.u32 %v1800
        %v1803 = vmul.u32 %v1796, %v1787
        %v1804 = vadd.s32 %v1799, %v1801
        %vm1805 = vc.u32 %v1799, %v1801
        %v1806 = vadd.s32 %v1802, 1
        %v1807 = vsel %vm1805, %v1806, %v1802
        %v1808 = vadd.s32 %v1803, %v1807
        %v1809 = vadd.s32 %v1808, 536870912
        %v1810 = vshrl.u32 %v1809, 30
        %v1811 = vshll.u32 %v1810, 30
        %v1812 = vsub.s32 %v1808, %v1811
        %vm1813 = vcmp.lt.s32.totalorder %v1812, 0
        %v1814 = vsub.s32 0, %v1812
        %v1815 = vsel %vm1813, %v1814, %v1812
        %v1816 = vclz %v1815
        %v1817 = vsub.s32 %v1816, 2
        %vm1818 = vcmp.gt.s32.totalorder 0, %v1817
        %v1819 = vsel %vm1818, 0, %v1817
        %v1820 = vsub.s32 32, %v1819
        %v1821 = vshll.u32 %v1812, %v1819
        %v1822 = vshrl.u32 %v1804, %v1820
        %v1823 = vor.u32 %v1821, %v1822
        %v1824 = vsub.s32 4294967266, %v1819
        %v1825 = vadd.s32 %v1824, 127
        %v1826 = vshll.u32 %v1825, 23
        %v1827 = vor.u32 4788187, %v1826
        %v1828 = vand.u32 2147483647, %v1827
        %v1830 = vcvt.s32.f32 %v1823
        %v1831 = vmul.f32 %v1830, %v1828
        %v1832 = vxor.u32 %v1831, 2147483648
        %v1833 = vsel %vm1750, %v1832, %v1831
        %v1834 = vsub.s32 4, %v1810
        %v1835 = vsel %vm1750, %v1834, %v1810
        %v1836 = vsel %vm1749, %v393, %v1833
        %v1837 = vsel %vm1749, 0, %v1835
        %v1838 = vcosq.f32.pop %v1836
        %v1839 = vsinq.f32.pop %v1836
        %vm1840 = vweird.f32 %v393
        %v1841 = vadd.s32 %v1837, 3
        %v1842 = vand.u32 %v1841, 3
        %vm1843 = vcmp.lt.s32.totalorder %v1842, 2
        %vm1844 = vcmp.eq.s32.totalorder %v1842, 0
        %v1845 = vxor.u32 %v1839, 2147483648
        %v1846 = vsel %vm1844, %v1838, %v1845
        %vm1847 = vcmp.eq.s32.totalorder %v1842, 2
        %v1848 = vxor.u32 %v1838, 2147483648
        %v1849 = vsel %vm1847, %v1848, %v1839
        %v1850 = vsel %vm1843, %v1846, %v1849
        %v1851 = vsel %vm1840, nan, %v1850
        %v1852 = vand.u32 2147483647, %v394
        %vm1853 = vcmp.le.f32.partialorder %v1852, 0.7853982
        %vm1854 = vcmp.lt.s32.totalorder %v394, 0
        %v1855 = vand.u32 %v394, 2139095040
        %v1856 = vshrl.u32 %v1855, 23
        %v1857 = vsub.s32 %v1856, 127
        %v1858 = vand.u32 2147483647, %v394
        %v1859 = vand.u32 %v1858, 8388607
        %v1860 = vor.u32 %v1859, 8388608
        %v1861 = vsub.s32 0, %v1860
        %v1862 = vadd.s32 %v1857, 1
        %vm1863 = vcmp.gt.s32.totalorder %v1862, 0
        %v1864 = vsel %vm1863, %v1862, 0
        %v1865 = vshrl.u32 %v1864, 5
        %v1866 = vand.u32 %v1864, 31
        %v1867 = vsub.s32 32, %v1866
        %v1868 = vshrl.u32 683565275, %v1867
        %v1869 = vshll.u32 683565275, %v1866
        %v1870 = vshrl.u32 2475754826, %v1867
        %v1871 = vor.u32 %v1869, %v1870
        %v1872 = vshll.u32 2475754826, %v1866
        %v1873 = vshrl.u32 2131351028, %v1867
        %v1874 = vor.u32 %v1872, %v1873
        %v1875 = vshll.u32 2131351028, %v1866
        %v1876 = vshrl.u32 2102212464, %v1867
        %v1877 = vor.u32 %v1875, %v1876
        %v1878 = vshll.u32 2102212464, %v1866
        %v1879 = vshrl.u32 920167782, %v1867
        %v1880 = vor.u32 %v1878, %v1879
        %v1881 = vshll.u32 920167782, %v1866
        %v1882 = vshrl.u32 1326507024, %v1867
        %v1883 = vor.u32 %v1881, %v1882
        %vm1884 = vcmp.lt.s32.totalorder %v1865, 1
        %vm1885 = vcmp.lt.s32.totalorder %v1865, 2
        %vm1886 = vcmp.lt.s32.totalorder %v1865, 3
        %vm1887 = vcmp.lt.s32.totalorder %v1865, 4
        %v1888 = vsel %vm1884, %v1868, %v1871
        %v1889 = vsel %vm1887, %v1877, 2102212464
        %v1890 = vsel %vm1886, %v1874, %v1889
        %v1891 = vsel %vm1885, %v1888, %v1890
        %v1892 = vsel %vm1884, %v1871, %v1874
        %v1893 = vsel %vm1887, %v1880, 920167782
        %v1894 = vsel %vm1886, %v1877, %v1893
        %v1895 = vsel %vm1885, %v1892, %v1894
        %v1896 = vsel %vm1884, %v1874, %v1877
        %v1897 = vsel %vm1887, %v1883, 1326507024
        %v1898 = vsel %vm1886, %v1880, %v1897
        %v1899 = vsel %vm1885, %v1896, %v1898
        %v1900 = vshll.u32 %v1860, 8
        %v1901 = vmul.u32.u64.compose %v1900, %v1899
        %v1902 = vextract.low.u32 %v1901
        %v1903 = vextract.high.u32 %v1901
        %v1904 = vmul.u32.u64.compose %v1900, %v1895
        %v1905 = vextract.low.u32 %v1904
        %v1906 = vextract.high.u32 %v1904
        %v1907 = vmul.u32 %v1900, %v1891
        %v1908 = vadd.s32 %v1903, %v1905
        %vm1909 = vc.u32 %v1903, %v1905
        %v1910 = vadd.s32 %v1906, 1
        %v1911 = vsel %vm1909, %v1910, %v1906
        %v1912 = vadd.s32 %v1907, %v1911
        %v1913 = vadd.s32 %v1912, 536870912
        %v1914 = vshrl.u32 %v1913, 30
        %v1915 = vshll.u32 %v1914, 30
        %v1916 = vsub.s32 %v1912, %v1915
        %vm1917 = vcmp.lt.s32.totalorder %v1916, 0
        %v1918 = vsub.s32 0, %v1916
        %v1919 = vsel %vm1917, %v1918, %v1916
        %v1920 = vclz %v1919
        %v1921 = vsub.s32 %v1920, 2
        %vm1922 = vcmp.gt.s32.totalorder 0, %v1921
        %v1923 = vsel %vm1922, 0, %v1921
        %v1924 = vsub.s32 32, %v1923
        %v1925 = vshll.u32 %v1916, %v1923
        %v1926 = vshrl.u32 %v1908, %v1924
        %v1927 = vor.u32 %v1925, %v1926
        %v1928 = vsub.s32 4294967266, %v1923
        %v1929 = vadd.s32 %v1928, 127
        %v1930 = vshll.u32 %v1929, 23
        %v1931 = vor.u32 4788187, %v1930
        %v1932 = vand.u32 2147483647, %v1931
        %v1934 = vcvt.s32.f32 %v1927
        %v1935 = vmul.f32 %v1934, %v1932
        %v1936 = vxor.u32 %v1935, 2147483648
        %v1937 = vsel %vm1854, %v1936, %v1935
        %v1938 = vsub.s32 4, %v1914
        %v1939 = vsel %vm1854, %v1938, %v1914
        %v1940 = vsel %vm1853, %v394, %v1937
        %v1941 = vsel %vm1853, 0, %v1939
        %v1942 = vcosq.f32.pop %v1940
        %v1943 = vsinq.f32.pop %v1940
        %vm1944 = vweird.f32 %v394
        %v1945 = vadd.s32 %v1941, 3
        %v1946 = vand.u32 %v1945, 3
        %vm1947 = vcmp.lt.s32.totalorder %v1946, 2
        %vm1948 = vcmp.eq.s32.totalorder %v1946, 0
        %v1949 = vxor.u32 %v1943, 2147483648
        %v1950 = vsel %vm1948, %v1942, %v1949
        %vm1951 = vcmp.eq.s32.totalorder %v1946, 2
        %v1952 = vxor.u32 %v1942, 2147483648
        %v1953 = vsel %vm1951, %v1952, %v1943
        %v1954 = vsel %vm1947, %v1950, %v1953
        %v1955 = vsel %vm1944, nan, %v1954
        %v1956 = vand.u32 2147483647, %v395
        %vm1957 = vcmp.le.f32.partialorder %v1956, 0.7853982
        %vm1958 = vcmp.lt.s32.totalorder %v395, 0
        %v1959 = vand.u32 %v395, 2139095040
        %v1960 = vshrl.u32 %v1959, 23
        %v1961 = vsub.s32 %v1960, 127
        %v1962 = vand.u32 2147483647, %v395
        %v1963 = vand.u32 %v1962, 8388607
        %v1964 = vor.u32 %v1963, 8388608
        %v1965 = vsub.s32 0, %v1964
        %v1966 = vadd.s32 %v1961, 1
        %vm1967 = vcmp.gt.s32.totalorder %v1966, 0
        %v1968 = vsel %vm1967, %v1966, 0
        %v1969 = vshrl.u32 %v1968, 5
        %v1970 = vand.u32 %v1968, 31
        %v1971 = vsub.s32 32, %v1970
        %v1972 = vshrl.u32 683565275, %v1971
        %v1973 = vshll.u32 683565275, %v1970
        %v1974 = vshrl.u32 2475754826, %v1971
        %v1975 = vor.u32 %v1973, %v1974
        %v1976 = vshll.u32 2475754826, %v1970
        %v1977 = vshrl.u32 2131351028, %v1971
        %v1978 = vor.u32 %v1976, %v1977
        %v1979 = vshll.u32 2131351028, %v1970
        %v1980 = vshrl.u32 2102212464, %v1971
        %v1981 = vor.u32 %v1979, %v1980
        %v1982 = vshll.u32 2102212464, %v1970
        %v1983 = vshrl.u32 920167782, %v1971
        %v1984 = vor.u32 %v1982, %v1983
        %v1985 = vshll.u32 920167782, %v1970
        %v1986 = vshrl.u32 1326507024, %v1971
        %v1987 = vor.u32 %v1985, %v1986
        %vm1988 = vcmp.lt.s32.totalorder %v1969, 1
        %vm1989 = vcmp.lt.s32.totalorder %v1969, 2
        %vm1990 = vcmp.lt.s32.totalorder %v1969, 3
        %vm1991 = vcmp.lt.s32.totalorder %v1969, 4
        %v1992 = vsel %vm1988, %v1972, %v1975
        %v1993 = vsel %vm1991, %v1981, 2102212464
        %v1994 = vsel %vm1990, %v1978, %v1993
        %v1995 = vsel %vm1989, %v1992, %v1994
        %v1996 = vsel %vm1988, %v1975, %v1978
        %v1997 = vsel %vm1991, %v1984, 920167782
        %v1998 = vsel %vm1990, %v1981, %v1997
        %v1999 = vsel %vm1989, %v1996, %v1998
        %v2000 = vsel %vm1988, %v1978, %v1981
        %v2001 = vsel %vm1991, %v1987, 1326507024
        %v2002 = vsel %vm1990, %v1984, %v2001
        %v2003 = vsel %vm1989, %v2000, %v2002
        %v2004 = vshll.u32 %v1964, 8
        %v2005 = vmul.u32.u64.compose %v2004, %v2003
        %v2006 = vextract.low.u32 %v2005
        %v2007 = vextract.high.u32 %v2005
        %v2008 = vmul.u32.u64.compose %v2004, %v1999
        %v2009 = vextract.low.u32 %v2008
        %v2010 = vextract.high.u32 %v2008
        %v2011 = vmul.u32 %v2004, %v1995
        %v2012 = vadd.s32 %v2007, %v2009
        %vm2013 = vc.u32 %v2007, %v2009
        %v2014 = vadd.s32 %v2010, 1
        %v2015 = vsel %vm2013, %v2014, %v2010
        %v2016 = vadd.s32 %v2011, %v2015
        %v2017 = vadd.s32 %v2016, 536870912
        %v2018 = vshrl.u32 %v2017, 30
        %v2019 = vshll.u32 %v2018, 30
        %v2020 = vsub.s32 %v2016, %v2019
        %vm2021 = vcmp.lt.s32.totalorder %v2020, 0
        %v2022 = vsub.s32 0, %v2020
        %v2023 = vsel %vm2021, %v2022, %v2020
        %v2024 = vclz %v2023
        %v2025 = vsub.s32 %v2024, 2
        %vm2026 = vcmp.gt.s32.totalorder 0, %v2025
        %v2027 = vsel %vm2026, 0, %v2025
        %v2028 = vsub.s32 32, %v2027
        %v2029 = vshll.u32 %v2020, %v2027
        %v2030 = vshrl.u32 %v2012, %v2028
        %v2031 = vor.u32 %v2029, %v2030
        %v2032 = vsub.s32 4294967266, %v2027
        %v2033 = vadd.s32 %v2032, 127
        %v2034 = vshll.u32 %v2033, 23
        %v2035 = vor.u32 4788187, %v2034
        %v2036 = vand.u32 2147483647, %v2035
        %v2038 = vcvt.s32.f32 %v2031
        %v2039 = vmul.f32 %v2038, %v2036
        %v2040 = vxor.u32 %v2039, 2147483648
        %v2041 = vsel %vm1958, %v2040, %v2039
        %v2042 = vsub.s32 4, %v2018
        %v2043 = vsel %vm1958, %v2042, %v2018
        %v2044 = vsel %vm1957, %v395, %v2041
        %v2045 = vsel %vm1957, 0, %v2043
        %v2046 = vcosq.f32.pop %v2044
        %v2047 = vsinq.f32.pop %v2044
        %vm2048 = vweird.f32 %v395
        %v2049 = vadd.s32 %v2045, 3
        %v2050 = vand.u32 %v2049, 3
        %vm2051 = vcmp.lt.s32.totalorder %v2050, 2
        %vm2052 = vcmp.eq.s32.totalorder %v2050, 0
        %v2053 = vxor.u32 %v2047, 2147483648
        %v2054 = vsel %vm2052, %v2046, %v2053
        %vm2055 = vcmp.eq.s32.totalorder %v2050, 2
        %v2056 = vxor.u32 %v2046, 2147483648
        %v2057 = vsel %vm2055, %v2056, %v2047
        %v2058 = vsel %vm2051, %v2054, %v2057
        %v2059 = vsel %vm2048, nan, %v2058
        %2060 = vst [vmem:[%s94] sm:$0xff] %v499
        %2061 = vst [vmem:[%s94 + $0x8] sm:$0xff] %v603
        %2062 = vst [vmem:[%s94 + $0x10] sm:$0xff] %v707
        %2063 = vst [vmem:[%s94 + $0x18] sm:$0xff] %v811
        %2064 = vst [vmem:[%s94 + $0x20] sm:$0xff] %v915
        %2065 = vst [vmem:[%s94 + $0x28] sm:$0xff] %v1019
        %2066 = vst [vmem:[%s94 + $0x30] sm:$0xff] %v1123
        %2067 = vst [vmem:[%s94 + $0x38] sm:$0xff] %v1227
        %2068 = vst [vmem:[%s94 + $0x40] sm:$0xff] %v1331
        %2069 = vst [vmem:[%s94 + $0x48] sm:$0xff] %v1435
        %2070 = vst [vmem:[%s94 + $0x50] sm:$0xff] %v1539
        %2071 = vst [vmem:[%s94 + $0x58] sm:$0xff] %v1643
        %2072 = vst [vmem:[%s94 + $0x60] sm:$0xff] %v1747
        %2073 = vst [vmem:[%s94 + $0x68] sm:$0xff] %v1851
        %2074 = vst [vmem:[%s94 + $0x70] sm:$0xff] %v1955
        %2075 = vst [vmem:[%s94 + $0x78] sm:$0xff] %v2059
        %s2076 = sand.u32 %s44, 1
        %s2077 = scalar_lea.sflag [#allocation3], %s2076
        %s2078 = sand.u32 %s44, 1
        %s2079 = smul.addr %s2078, 128
        %s2080 = scalar_lea.vmem [#allocation2], %s2079
        // Predicated region
        $region25: #{tpu_custom_call.1} parent=23 // pred_check
          %p2081 = pneg %p54
        $region26: #{tpu_custom_call.1} parent=23 // pred_check_branch
          %2083 = sbr.rel (%p2081) target = $region28
        $region27: #{tpu_custom_call.1} parent=23 // pred_region
          %s2085 = ssub.s32 2048, 2048
          %2086 = vsyncadd %s2077, %s2085
          %s2087 = smul.addr %s15, 128
          %s2088 = scalar_lea.hbm %s1, %s2087
          %s2089 = sshll.u32 %s2080, 4
          %s2090 = int_to_ptr.vmem [resolvable:$true] %s2089
          %2095 = dma.vmem_to_hbm [thread:$0]  %s2090, 2048, %s2088, %s2077, 128, 256, 8
        $region28: #{tpu_custom_call.1} parent=23 // pred_fallthru
          _
      $region24: #{tpu_custom_call.1} parent=5 // pred_fallthru
        _
      %p2096 = scmp.le.s32.totalorder 2, %s10
      // Predicated region
      $region29: #{tpu_custom_call.1} parent=5 // pred_check
        %p2097 = pneg %p2096
      $region30: #{tpu_custom_call.1} parent=5 // pred_check_branch
        %2099 = sbr.rel (%p2097) target = $region32
      $region31: #{tpu_custom_call.1} parent=5 // pred_region
        %s2100 = ssub.s32 %s10, 2
        // Predicated region
        $region33: #{tpu_custom_call.1} parent=31 // pred_check
          %p2101 = pneg %p60
        $region34: #{tpu_custom_call.1} parent=31 // pred_check_branch
          %2103 = sbr.rel (%p2101) target = $region36
        $region35: #{tpu_custom_call.1} parent=31 // pred_region
          %s2104 = sand.u32 %s45, 1
          %s2105 = scalar_lea.sflag [#allocation3], %s2104
          %s2106 = sand.u32 %s45, 1
          %s2107 = smul.addr %s2106, 128
          %s2108 = scalar_lea.vmem [#allocation2], %s2107
          %2109 = dma.done %s2105, 2048
        $region36: #{tpu_custom_call.1} parent=31 // pred_fallthru
          _
      $region32: #{tpu_custom_call.1} parent=5 // pred_fallthru
        _
    $region6: #{tpu_custom_call.1} parent=1 // loop_footer
      %s14 = sadd.s32 1, %s10
    $region7: #{tpu_custom_call.1} parent=1 // loop_footer_branch
      %9 = sbr.rel target = $region3
    $region8: #{tpu_custom_call.1} parent=1 // loop_exit
      _
    %2110 = vsyncpa [#allocation3], 1
    %s2111 = scalar_lea.sflag [#allocation3], 1
    %2112 = vsyncpa %s2111, 1

</llo_original>
